<compile_context>
chip_gen: v7x
topology: tpu7x:2x2x1
jax: 0.10.0
libtpu: 0.0.40
codegen_flags: <defaults>
</compile_context>

<pallas_src>
import functools

import jax
import jax.numpy as jnp
from jax import lax
from jax.experimental import pallas as pl
from jax.experimental.pallas import tpu as pltpu

PROBIOU_EPS = 1e-7


def _int_pow(x, p):
    """x**p for integer-valued p via square-and-multiply (p=1 -> x, p=6 -> 3 muls)."""
    ip = int(round(float(p)))
    if abs(float(p) - ip) > 1e-6:
        raise ValueError(f"alpha/beta must be integer-valued for this kernel, got {p}")
    if ip == 0:
        return jnp.ones_like(x)
    result = None
    base = x
    while ip:
        if ip & 1:
            result = base if result is None else result * base
        ip >>= 1
        if ip:
            base = base * base
    return result


def _assigner_kernel(ps_ref, pb_ref, ap_ref, gtc_ref, gtr_ref,
                     tl_ref, tb_ref, ts_ref, fg_ref,
                     *, topk, alpha, beta, eps):
    C_pad = ps_ref.shape[1]          # padded class dim (multiple of 8)
    L = ps_ref.shape[2]
    n = gtc_ref.shape[1]
    C_out = ts_ref.shape[1]          # padded score-output class dim (multiple of 8)

    ps = ps_ref[0]       # (C_pad, L) predicted class scores, class-major (zero padded)
    pb = pb_ref[0]       # (6, L)     [x, y, w, h, cos(a), sin(a)]
    ap = ap_ref[0]       # (2, L)     anchor cxcy
    gtc = gtc_ref[0]     # (n, 16)    [x, y, w, h, a, cos, sin, label, mask, 0...]
    gtr = gtr_ref[0]     # (8, n)     attr-major rows [x, y, w, h, a, label, 0, 0]

    anchor_x = ap[0:1, :]
    anchor_y = ap[1:2, :]

    px = pb[0:1, :]; py = pb[1:2, :]; pw = pb[2:3, :]; ph = pb[3:4, :]
    pcos = pb[4:5, :]; psin = pb[5:6, :]

    gx = gtc[:, 0:1]; gy = gtc[:, 1:2]; gw = gtc[:, 2:3]; gh = gtc[:, 3:4]
    gcos = gtc[:, 5:6]; gsin = gtc[:, 6:7]
    gl_f = gtc[:, 7:8]                       # (n, 1) gt labels (f32)
    mg = gtc[:, 8:9]                         # (n, 1) pad-gt mask

    # ---------------- rotated IoU (ProbIoU) -> overlaps (n, L) ----------------
    def _cov(w, h, c, s):
        w2 = (w * w) * (1.0 / 12.0)
        h2 = (h * h) * (1.0 / 12.0)
        return (w2 * c * c + h2 * s * s,
                w2 * s * s + h2 * c * c,
                (w2 - h2) * c * s)

    a1, b1, c1 = _cov(gw, gh, gcos, gsin)    # (n, 1)  gt
    a2, b2, c2 = _cov(pw, ph, pcos, psin)    # (1, L)  pred

    dx = px - gx                             # (n, L)
    dy = py - gy                             # (n, L)
    sA = a1 + a2
    sB = b1 + b2
    sC = c1 + c2
    sAB_mC2 = sA * sB - sC * sC
    denom = sAB_mC2 + PROBIOU_EPS
    # fused t1 + t2 -> single (n, L) divide
    num = 0.25 * (sA * dy * dy + sB * dx * dx) - 0.5 * (sC * dx * dy)
    t12 = num / denom
    det1 = jnp.maximum(a1 * b1 - c1 * c1, 0.0)   # (n, 1)
    det2 = jnp.maximum(a2 * b2 - c2 * c2, 0.0)   # (1, L)
    sd12 = jnp.sqrt(det1) * jnp.sqrt(det2)       # sqrt on small shapes only
    t3 = 0.5 * jnp.log(sAB_mC2 / (4.0 * sd12 + PROBIOU_EPS) + PROBIOU_EPS)
    bd = jnp.clip(t12 + t3, PROBIOU_EPS, 100.0)
    hd = jnp.sqrt(1.0 - jnp.exp(-bd) + PROBIOU_EPS)
    overlaps = jnp.maximum(1.0 - hd, 0.0)        # (n, L)

    # -------- bbox_scores: pred_scores gathered at gt label (one-hot dot) -----
    gl_i = gl_f.astype(jnp.int32)                                      # (n, 1)
    onehot_nc = (gl_i == lax.broadcasted_iota(jnp.int32, (1, C_pad), 1)
                 ).astype(jnp.float32)                                 # (n, C_pad)
    bbox_scores = jnp.dot(onehot_nc, ps,
                          preferred_element_type=jnp.float32)          # (n, L)

    align_metric = _int_pow(bbox_scores, alpha) * _int_pow(overlaps, beta)

    # ---------------- check_points_in_rotated_boxes ---------------------------
    ax = gx + 0.5 * gw * gcos - 0.5 * gh * gsin          # corner a
    ay = gy + 0.5 * gw * gsin + 0.5 * gh * gcos
    ab_x = -gw * gcos
    ab_y = -gw * gsin
    ad_x = gh * gsin
    ad_y = -gh * gcos
    ap_x = anchor_x - ax                                 # (n, L)
    ap_y = anchor_y - ay
    norm_ab = ab_x * ab_x + ab_y * ab_y                  # (n, 1)
    norm_ad = ad_x * ad_x + ad_y * ad_y
    dot_ab = ap_x * ab_x + ap_y * ab_y
    dot_ad = ap_x * ad_x + ap_y * ad_y
    mask_in = ((dot_ab >= 0.0) & (dot_ab <= norm_ab)
               & (dot_ad >= 0.0) & (dot_ad <= norm_ad)).astype(jnp.float32)

    # ---------------- select_topk_candidates ----------------------------------
    # Pack nonnegative metric bits (f32 -> order-preserving int32) with the
    # reversed lane index in the low bits: keys are unique per row, so each
    # iteration needs only ONE lane max-reduce, masks exactly one lane, and
    # ties break toward the first occurrence. Membership = lanes that got
    # masked (key driven negative).  Invalid-gt rows are handled later by *mg.
    metrics = align_metric * mask_in                     # (n, L), >= 0
    lane_bits = max((L - 1).bit_length(), 1)
    idx_mask = (1 << lane_bits) - 1
    iota_l = lax.broadcasted_iota(jnp.int32, (1, L), 1)  # (1, L)
    rev_idx = (L - 1) - iota_l
    val_bits = pltpu.bitcast(metrics, jnp.int32)         # (n, L)
    key = (val_bits & jnp.int32(~idx_mask)) | rev_idx    # (n, L), unique per row
    neg_key = jnp.int32(jnp.iinfo(jnp.int32).min)

    work = key
    for _ in range(topk):                                # unrolled: topk XLU reduces
        cur = jnp.max(work, axis=-1, keepdims=True)
        work = jnp.where(work == cur, neg_key, work)
    is_in_topk = (work < 0).astype(jnp.float32)          # selected lanes were masked

    mask_pos = is_in_topk * mask_in * mg                 # (n, L)

    # ---------------- select_highest_overlaps ---------------------------------
    iota_n = lax.broadcasted_iota(jnp.int32, (n, 1), 0)  # (n, 1)
    fg = jnp.sum(mask_pos, axis=0, keepdims=True)        # (1, L)
    ov_max = jnp.max(overlaps, axis=0, keepdims=True)
    max_ov_idx = jnp.min(jnp.where(overlaps == ov_max, iota_n, n),
                         axis=0, keepdims=True)          # (1, L)
    is_max_ov = (iota_n == max_ov_idx).astype(jnp.float32)
    mask_pos = jnp.where(fg > 1.0, is_max_ov, mask_pos)
    fg = jnp.sum(mask_pos, axis=0, keepdims=True)        # (1, L)
    mp_max = jnp.max(mask_pos, axis=0, keepdims=True)
    target_gt_idx = jnp.min(jnp.where(mask_pos == mp_max, iota_n, n),
                            axis=0, keepdims=True)       # (1, L) int32

    # ---------------- get_targets: one-hot dot gather --------------------------
    onehot_tg = (iota_n == target_gt_idx).astype(jnp.float32)            # (n, L)
    tb8 = jnp.dot(gtr, onehot_tg, preferred_element_type=jnp.float32)    # (8, L)
    tlab = jnp.maximum(tb8[5:6, :], 0.0).astype(jnp.int32)               # (1, L)

    # normalization factor
    am = align_metric * mask_pos
    pos_align = jnp.max(am, axis=-1, keepdims=True)                      # (n, 1)
    pos_ov = jnp.max(overlaps * mask_pos, axis=-1, keepdims=True)        # (n, 1)
    scale = pos_ov / (pos_align + eps)                                   # (n, 1)
    norm = jnp.max(am * scale, axis=0, keepdims=True)                    # (1, L)

    # ---------------- stores (lane-dense block stores) -------------------------
    tl_ref[0] = tlab
    fg_ref[0] = fg
    tb_ref[0] = tb8[0:5, :]
    # Padded class rows (>= num_classes) are zero since labels < num_classes,
    # so the full (C_out, L) block store is unmasked and needs no extra work.
    iota_c = lax.broadcasted_iota(jnp.int32, (C_out, 1), 0)              # (C_out, 1)
    ts_ref[0] = jnp.where((iota_c == tlab) & (fg > 0.0), norm, 0.0)      # (C_out, L)


def rotated_task_aligned_assigner(pred_scores, pred_bboxes, anchor_points,
                                  gt_labels, gt_bboxes, mask_gt,
                                  topk=13, alpha=1.0, beta=6.0, eps=1e-9,
                                  num_classes=4):
    B, L, C = pred_scores.shape
    n = gt_bboxes.shape[1]
    assert C == num_classes
    C_pad = ((C + 7) // 8) * 8   # pad class dim: K % 8 == 0 for the one-hot dot
                                 # and full-vreg (8-sublane) score stores.

    # glue: transpose to lane-major layouts, precompute sin/cos, pack GT inputs.
    ps_t = jnp.transpose(pred_scores.astype(jnp.float32), (0, 2, 1))        # (B, C, L)
    if C_pad != C:
        ps_t = jnp.pad(ps_t, ((0, 0), (0, C_pad - C), (0, 0)))              # (B, C_pad, L)
    pb_aug = jnp.concatenate([pred_bboxes[..., :4],
                              jnp.cos(pred_bboxes[..., 4:5]),
                              jnp.sin(pred_bboxes[..., 4:5])], axis=-1)
    pb_t = jnp.transpose(pb_aug.astype(jnp.float32), (0, 2, 1))             # (B, 6, L)
    ap_t = jnp.transpose(anchor_points.astype(jnp.float32), (0, 2, 1))      # (1, 2, L)

    gb = gt_bboxes.astype(jnp.float32)                                      # (B, n, 5)
    gl_f = gt_labels.astype(jnp.float32)                                    # (B, n, 1)
    mg_f = mask_gt.astype(jnp.float32)                                      # (B, n, 1)
    # gt-major packed columns: [x, y, w, h, a, cos, sin, label, mask] -> (B, n, 16)
    gt_cols = jnp.concatenate([gb, jnp.cos(gb[..., 4:5]), jnp.sin(gb[..., 4:5]),
                               gl_f, mg_f], axis=-1)                        # (B, n, 9)
    gt_cols = jnp.pad(gt_cols, ((0, 0), (0, 0), (0, 16 - gt_cols.shape[-1])))
    # attribute-major rows [x, y, w, h, a, label, 0, 0] -> (B, 8, n) for the target dot
    gt_rows = jnp.concatenate([gb, gl_f], axis=-1)                          # (B, n, 6)
    gt_rows = jnp.pad(gt_rows, ((0, 0), (0, 0), (0, 2)))                    # (B, n, 8)
    gt_rows = jnp.transpose(gt_rows, (0, 2, 1))                             # (B, 8, n)

    kernel = functools.partial(_assigner_kernel, topk=topk, alpha=alpha,
                               beta=beta, eps=eps)

    # TODO(synk): for production anchor counts (L ~ 8k-21k) add an L tile axis to
    # the grid (marked "parallel", ~half tile on v7x) with a carried two-pass
    # top-k so the (n, L) working set stays within scoped VMEM; at these toy
    # shapes the single per-batch block fits easily.
    grid_spec = pltpu.PrefetchScalarGridSpec(
        num_scalar_prefetch=0,
        grid=(B,),
        in_specs=[
            pl.BlockSpec((1, C_pad, L), lambda b: (b, 0, 0)),
            pl.BlockSpec((1, 6, L), lambda b: (b, 0, 0)),
            pl.BlockSpec((1, 2, L), lambda b: (0, 0, 0)),
            pl.BlockSpec((1, n, 16), lambda b: (b, 0, 0)),
            pl.BlockSpec((1, 8, n), lambda b: (b, 0, 0)),
        ],
        out_specs=[
            pl.BlockSpec((1, 1, L), lambda b: (b, 0, 0)),
            pl.BlockSpec((1, 5, L), lambda b: (b, 0, 0)),
            pl.BlockSpec((1, C_pad, L), lambda b: (b, 0, 0)),
            pl.BlockSpec((1, 1, L), lambda b: (b, 0, 0)),
        ],
    )
    out_shape = (
        jax.ShapeDtypeStruct((B, 1, L), jnp.int32),       # target_labels
        jax.ShapeDtypeStruct((B, 5, L), jnp.float32),     # target_bboxes (box-major)
        jax.ShapeDtypeStruct((B, C_pad, L), jnp.float32), # target_scores (class-major, padded)
        jax.ShapeDtypeStruct((B, 1, L), jnp.float32),     # fg_mask (float count)
    )
    tl, tb, ts, fg = pl.pallas_call(
        kernel,
        out_shape=out_shape,
        grid_spec=grid_spec,
        compiler_params=pltpu.CompilerParams(dimension_semantics=("parallel",)),
    )(ps_t, pb_t, ap_t, gt_cols, gt_rows)

    target_labels = tl[:, 0, :]                             # (B, L) int32
    target_bboxes = jnp.transpose(tb, (0, 2, 1))            # (B, L, 5)
    target_scores = jnp.transpose(ts, (0, 2, 1))[:, :, :C]  # (B, L, C)
    fg_mask = fg[:, 0, :] > 0.0                             # (B, L) bool
    return target_labels, target_bboxes, target_scores, fg_mask


if __name__ == "__main__":
    key = jax.random.PRNGKey(0)
    B, L, C, n = 2, 256, 4, 8
    ks = jax.random.split(key, 8)

    pred_scores = jax.nn.sigmoid(jax.random.normal(ks[0], (B, L, C), jnp.float32))
    ctr = jax.random.uniform(ks[1], (B, L, 2), minval=0.0, maxval=32.0)
    wh = jax.random.uniform(ks[2], (B, L, 2), minval=2.0, maxval=10.0)
    ang = jax.random.uniform(ks[3], (B, L, 1), minval=-1.5, maxval=1.5)
    pred_bboxes = jnp.concatenate([ctr, wh, ang], axis=-1)                    # (B, L, 5)

    # anchor points: 16x16 grid, stride 2, "cxcy"
    xs = (jnp.arange(16, dtype=jnp.float32) + 0.5) * 2.0
    gxm, gym = jnp.meshgrid(xs, xs, indexing="xy")
    anchor_points = jnp.stack([gxm.reshape(-1), gym.reshape(-1)], axis=-1)[None]  # (1, 256, 2)

    gt_ctr = jax.random.uniform(ks[4], (B, n, 2), minval=4.0, maxval=28.0)
    gt_wh = jax.random.uniform(ks[5], (B, n, 2), minval=4.0, maxval=12.0)
    gt_ang = jax.random.uniform(ks[6], (B, n, 1), minval=-1.5, maxval=1.5)
    gt_bboxes = jnp.concatenate([gt_ctr, gt_wh, gt_ang], axis=-1)             # (B, n, 5)
    gt_labels = jax.random.randint(ks[7], (B, n, 1), 0, C).astype(jnp.int32)  # (B, n, 1)

    valid_counts = jnp.array([6, 4], dtype=jnp.int32)
    mask_gt = (jnp.arange(n)[None, :] < valid_counts[:, None]
               ).astype(jnp.float32)[..., None]                               # (B, n, 1)

    outs = rotated_task_aligned_assigner(pred_scores, pred_bboxes, anchor_points,
                                         gt_labels, gt_bboxes, mask_gt,
                                         topk=13, alpha=1.0, beta=6.0,
                                         eps=1e-9, num_classes=C)
    outs = jax.block_until_ready(outs)
    target_labels, target_bboxes, target_scores, fg_mask = outs
    assert target_labels.shape == (B, L)
    assert target_bboxes.shape == (B, L, 5)
    assert target_scores.shape == (B, L, C)
    assert fg_mask.shape == (B, L) and fg_mask.dtype == jnp.bool_
    print("KERNEL_OK")
</pallas_src>

<mosaic_0001>
module attributes {stable_mosaic.version = 11 : i64} {
  func.func @_assigner_kernel(%arg0: i32, %arg1: memref<1x8x256xf32, #tpu.memory_space<vmem>>, %arg2: memref<1x6x256xf32, #tpu.memory_space<vmem>>, %arg3: memref<1x2x256xf32, #tpu.memory_space<vmem>>, %arg4: memref<1x8x16xf32, #tpu.memory_space<vmem>>, %arg5: memref<1x8x8xf32, #tpu.memory_space<vmem>>, %arg6: memref<1x1x256xi32, #tpu.memory_space<vmem>>, %arg7: memref<1x5x256xf32, #tpu.memory_space<vmem>>, %arg8: memref<1x8x256xf32, #tpu.memory_space<vmem>>, %arg9: memref<1x1x256xf32, #tpu.memory_space<vmem>>) attributes {dimension_semantics = [#tpu.dimension_semantics<parallel>], iteration_bounds = array<i64: 2>, scalar_prefetch = 0 : i64, scratch_operands = 0 : i64, tpu.core_type = #tpu.core_type<tc>, window_params = [{transform_indices = @transform_0, window_bounds = array<i64: 1, 8, 256>}, {transform_indices = @transform_1, window_bounds = array<i64: 1, 6, 256>}, {pipeline_mode = #tpu.pipeline_mode<synchronous>, transform_indices = @transform_2, window_bounds = array<i64: 1, 2, 256>}, {transform_indices = @transform_3, window_bounds = array<i64: 1, 8, 16>}, {transform_indices = @transform_4, window_bounds = array<i64: 1, 8, 8>}, {transform_indices = @transform_5, window_bounds = array<i64: 1, 1, 256>}, {transform_indices = @transform_6, window_bounds = array<i64: 1, 5, 256>}, {transform_indices = @transform_7, window_bounds = array<i64: 1, 8, 256>}, {transform_indices = @transform_8, window_bounds = array<i64: 1, 1, 256>}]} {
    %c0 = arith.constant 0 : index
    %c0_0 = arith.constant 0 : index
    %c0_1 = arith.constant 0 : index
    %0 = vector.load %arg1[%c0, %c0_0, %c0_1] : memref<1x8x256xf32, #tpu.memory_space<vmem>>, vector<1x8x256xf32>
    %1 = vector.shape_cast %0 : vector<1x8x256xf32> to vector<8x256xf32>
    %c0_2 = arith.constant 0 : index
    %c0_3 = arith.constant 0 : index
    %c0_4 = arith.constant 0 : index
    %2 = vector.load %arg2[%c0_2, %c0_3, %c0_4] : memref<1x6x256xf32, #tpu.memory_space<vmem>>, vector<1x6x256xf32>
    %3 = vector.shape_cast %2 : vector<1x6x256xf32> to vector<6x256xf32>
    %c0_5 = arith.constant 0 : index
    %c0_6 = arith.constant 0 : index
    %c0_7 = arith.constant 0 : index
    %4 = vector.load %arg3[%c0_5, %c0_6, %c0_7] : memref<1x2x256xf32, #tpu.memory_space<vmem>>, vector<1x2x256xf32>
    %5 = vector.shape_cast %4 : vector<1x2x256xf32> to vector<2x256xf32>
    %c0_8 = arith.constant 0 : index
    %c0_9 = arith.constant 0 : index
    %c0_10 = arith.constant 0 : index
    %6 = vector.load %arg4[%c0_8, %c0_9, %c0_10] : memref<1x8x16xf32, #tpu.memory_space<vmem>>, vector<1x8x16xf32>
    %7 = vector.shape_cast %6 : vector<1x8x16xf32> to vector<8x16xf32>
    %c0_11 = arith.constant 0 : index
    %c0_12 = arith.constant 0 : index
    %c0_13 = arith.constant 0 : index
    %8 = vector.load %arg5[%c0_11, %c0_12, %c0_13] : memref<1x8x8xf32, #tpu.memory_space<vmem>>, vector<1x8x8xf32>
    %9 = vector.shape_cast %8 : vector<1x8x8xf32> to vector<8x8xf32>
    %10 = vector.extract_strided_slice %5 {offsets = [0, 0], sizes = [1, 256], strides = [1, 1]} : vector<2x256xf32> to vector<1x256xf32>
    %11 = vector.extract_strided_slice %5 {offsets = [1, 0], sizes = [1, 256], strides = [1, 1]} : vector<2x256xf32> to vector<1x256xf32>
    %12 = vector.extract_strided_slice %3 {offsets = [0, 0], sizes = [1, 256], strides = [1, 1]} : vector<6x256xf32> to vector<1x256xf32>
    %13 = vector.extract_strided_slice %3 {offsets = [1, 0], sizes = [1, 256], strides = [1, 1]} : vector<6x256xf32> to vector<1x256xf32>
    %14 = vector.extract_strided_slice %3 {offsets = [2, 0], sizes = [1, 256], strides = [1, 1]} : vector<6x256xf32> to vector<1x256xf32>
    %15 = vector.extract_strided_slice %3 {offsets = [3, 0], sizes = [1, 256], strides = [1, 1]} : vector<6x256xf32> to vector<1x256xf32>
    %16 = vector.extract_strided_slice %3 {offsets = [4, 0], sizes = [1, 256], strides = [1, 1]} : vector<6x256xf32> to vector<1x256xf32>
    %17 = vector.extract_strided_slice %3 {offsets = [5, 0], sizes = [1, 256], strides = [1, 1]} : vector<6x256xf32> to vector<1x256xf32>
    %18 = vector.extract_strided_slice %7 {offsets = [0, 0], sizes = [8, 1], strides = [1, 1]} : vector<8x16xf32> to vector<8x1xf32>
    %19 = vector.extract_strided_slice %7 {offsets = [0, 1], sizes = [8, 1], strides = [1, 1]} : vector<8x16xf32> to vector<8x1xf32>
    %20 = vector.extract_strided_slice %7 {offsets = [0, 2], sizes = [8, 1], strides = [1, 1]} : vector<8x16xf32> to vector<8x1xf32>
    %21 = vector.extract_strided_slice %7 {offsets = [0, 3], sizes = [8, 1], strides = [1, 1]} : vector<8x16xf32> to vector<8x1xf32>
    %22 = vector.extract_strided_slice %7 {offsets = [0, 5], sizes = [8, 1], strides = [1, 1]} : vector<8x16xf32> to vector<8x1xf32>
    %23 = vector.extract_strided_slice %7 {offsets = [0, 6], sizes = [8, 1], strides = [1, 1]} : vector<8x16xf32> to vector<8x1xf32>
    %24 = vector.extract_strided_slice %7 {offsets = [0, 7], sizes = [8, 1], strides = [1, 1]} : vector<8x16xf32> to vector<8x1xf32>
    %25 = vector.extract_strided_slice %7 {offsets = [0, 8], sizes = [8, 1], strides = [1, 1]} : vector<8x16xf32> to vector<8x1xf32>
    %26 = arith.mulf %20, %20 : vector<8x1xf32>
    %cst = arith.constant 0.0833333358 : f32
    %27 = vector.broadcast %cst : f32 to vector<8x1xf32>
    %28 = arith.mulf %26, %27 : vector<8x1xf32>
    %29 = arith.mulf %21, %21 : vector<8x1xf32>
    %cst_14 = arith.constant 0.0833333358 : f32
    %30 = vector.broadcast %cst_14 : f32 to vector<8x1xf32>
    %31 = arith.mulf %29, %30 : vector<8x1xf32>
    %32 = arith.mulf %28, %22 : vector<8x1xf32>
    %33 = arith.mulf %32, %22 : vector<8x1xf32>
    %34 = arith.mulf %31, %23 : vector<8x1xf32>
    %35 = arith.mulf %34, %23 : vector<8x1xf32>
    %36 = arith.addf %33, %35 : vector<8x1xf32>
    %37 = arith.mulf %28, %23 : vector<8x1xf32>
    %38 = arith.mulf %37, %23 : vector<8x1xf32>
    %39 = arith.mulf %31, %22 : vector<8x1xf32>
    %40 = arith.mulf %39, %22 : vector<8x1xf32>
    %41 = arith.addf %38, %40 : vector<8x1xf32>
    %42 = arith.subf %28, %31 : vector<8x1xf32>
    %43 = arith.mulf %42, %22 : vector<8x1xf32>
    %44 = arith.mulf %43, %23 : vector<8x1xf32>
    %45 = arith.mulf %14, %14 : vector<1x256xf32>
    %cst_15 = arith.constant 0.0833333358 : f32
    %46 = vector.broadcast %cst_15 : f32 to vector<1x256xf32>
    %47 = arith.mulf %45, %46 : vector<1x256xf32>
    %48 = arith.mulf %15, %15 : vector<1x256xf32>
    %cst_16 = arith.constant 0.0833333358 : f32
    %49 = vector.broadcast %cst_16 : f32 to vector<1x256xf32>
    %50 = arith.mulf %48, %49 : vector<1x256xf32>
    %51 = arith.mulf %47, %16 : vector<1x256xf32>
    %52 = arith.mulf %51, %16 : vector<1x256xf32>
    %53 = arith.mulf %50, %17 : vector<1x256xf32>
    %54 = arith.mulf %53, %17 : vector<1x256xf32>
    %55 = arith.addf %52, %54 : vector<1x256xf32>
    %56 = arith.mulf %47, %17 : vector<1x256xf32>
    %57 = arith.mulf %56, %17 : vector<1x256xf32>
    %58 = arith.mulf %50, %16 : vector<1x256xf32>
    %59 = arith.mulf %58, %16 : vector<1x256xf32>
    %60 = arith.addf %57, %59 : vector<1x256xf32>
    %61 = arith.subf %47, %50 : vector<1x256xf32>
    %62 = arith.mulf %61, %16 : vector<1x256xf32>
    %63 = arith.mulf %62, %17 : vector<1x256xf32>
    %64 = vector.broadcast %12 : vector<1x256xf32> to vector<8x256xf32>
    %65 = vector.broadcast %18 : vector<8x1xf32> to vector<8x256xf32>
    %66 = arith.subf %64, %65 : vector<8x256xf32>
    %67 = vector.broadcast %13 : vector<1x256xf32> to vector<8x256xf32>
    %68 = vector.broadcast %19 : vector<8x1xf32> to vector<8x256xf32>
    %69 = arith.subf %67, %68 : vector<8x256xf32>
    %70 = vector.broadcast %36 : vector<8x1xf32> to vector<8x256xf32>
    %71 = vector.broadcast %55 : vector<1x256xf32> to vector<8x256xf32>
    %72 = arith.addf %70, %71 : vector<8x256xf32>
    %73 = vector.broadcast %41 : vector<8x1xf32> to vector<8x256xf32>
    %74 = vector.broadcast %60 : vector<1x256xf32> to vector<8x256xf32>
    %75 = arith.addf %73, %74 : vector<8x256xf32>
    %76 = vector.broadcast %44 : vector<8x1xf32> to vector<8x256xf32>
    %77 = vector.broadcast %63 : vector<1x256xf32> to vector<8x256xf32>
    %78 = arith.addf %76, %77 : vector<8x256xf32>
    %79 = arith.mulf %72, %75 : vector<8x256xf32>
    %80 = arith.mulf %78, %78 : vector<8x256xf32>
    %81 = arith.subf %79, %80 : vector<8x256xf32>
    %cst_17 = arith.constant 1.000000e-07 : f32
    %82 = vector.broadcast %cst_17 : f32 to vector<8x256xf32>
    %83 = arith.addf %81, %82 : vector<8x256xf32>
    %84 = arith.mulf %72, %69 : vector<8x256xf32>
    %85 = arith.mulf %84, %69 : vector<8x256xf32>
    %86 = arith.mulf %75, %66 : vector<8x256xf32>
    %87 = arith.mulf %86, %66 : vector<8x256xf32>
    %88 = arith.addf %85, %87 : vector<8x256xf32>
    %cst_18 = arith.constant 2.500000e-01 : f32
    %89 = vector.broadcast %cst_18 : f32 to vector<8x256xf32>
    %90 = arith.mulf %89, %88 : vector<8x256xf32>
    %91 = arith.mulf %78, %66 : vector<8x256xf32>
    %92 = arith.mulf %91, %69 : vector<8x256xf32>
    %cst_19 = arith.constant 5.000000e-01 : f32
    %93 = vector.broadcast %cst_19 : f32 to vector<8x256xf32>
    %94 = arith.mulf %93, %92 : vector<8x256xf32>
    %95 = arith.subf %90, %94 : vector<8x256xf32>
    %96 = arith.divf %95, %83 : vector<8x256xf32>
    %97 = arith.mulf %36, %41 : vector<8x1xf32>
    %98 = arith.mulf %44, %44 : vector<8x1xf32>
    %99 = arith.subf %97, %98 : vector<8x1xf32>
    %cst_20 = arith.constant 0.000000e+00 : f32
    %100 = vector.broadcast %cst_20 : f32 to vector<8x1xf32>
    %101 = arith.maximumf %99, %100 : vector<8x1xf32>
    %102 = arith.mulf %55, %60 : vector<1x256xf32>
    %103 = arith.mulf %63, %63 : vector<1x256xf32>
    %104 = arith.subf %102, %103 : vector<1x256xf32>
    %cst_21 = arith.constant 0.000000e+00 : f32
    %105 = vector.broadcast %cst_21 : f32 to vector<1x256xf32>
    %106 = arith.maximumf %104, %105 : vector<1x256xf32>
    %107 = math.sqrt %101 : vector<8x1xf32>
    %108 = math.sqrt %106 : vector<1x256xf32>
    %109 = vector.broadcast %107 : vector<8x1xf32> to vector<8x256xf32>
    %110 = vector.broadcast %108 : vector<1x256xf32> to vector<8x256xf32>
    %111 = arith.mulf %109, %110 : vector<8x256xf32>
    %cst_22 = arith.constant 4.000000e+00 : f32
    %112 = vector.broadcast %cst_22 : f32 to vector<8x256xf32>
    %113 = arith.mulf %112, %111 : vector<8x256xf32>
    %cst_23 = arith.constant 1.000000e-07 : f32
    %114 = vector.broadcast %cst_23 : f32 to vector<8x256xf32>
    %115 = arith.addf %113, %114 : vector<8x256xf32>
    %116 = arith.divf %81, %115 : vector<8x256xf32>
    %cst_24 = arith.constant 1.000000e-07 : f32
    %117 = vector.broadcast %cst_24 : f32 to vector<8x256xf32>
    %118 = arith.addf %116, %117 : vector<8x256xf32>
    %119 = math.log %118 : vector<8x256xf32>
    %cst_25 = arith.constant 5.000000e-01 : f32
    %120 = vector.broadcast %cst_25 : f32 to vector<8x256xf32>
    %121 = arith.mulf %120, %119 : vector<8x256xf32>
    %122 = arith.addf %96, %121 : vector<8x256xf32>
    %cst_26 = arith.constant 1.000000e-07 : f32
    %cst_27 = arith.constant 1.000000e+02 : f32
    %123 = vector.broadcast %cst_26 : f32 to vector<8x256xf32>
    %124 = arith.maximumf %123, %122 : vector<8x256xf32>
    %125 = vector.broadcast %cst_27 : f32 to vector<8x256xf32>
    %126 = arith.minimumf %125, %124 : vector<8x256xf32>
    %cst_28 = arith.constant 0.000000e+00 : f32
    %127 = vector.broadcast %cst_28 : f32 to vector<8x256xf32>
    %128 = arith.subf %127, %126 : vector<8x256xf32>
    %129 = math.exp %128 : vector<8x256xf32>
    %cst_29 = arith.constant 1.000000e+00 : f32
    %130 = vector.broadcast %cst_29 : f32 to vector<8x256xf32>
    %131 = arith.subf %130, %129 : vector<8x256xf32>
    %cst_30 = arith.constant 1.000000e-07 : f32
    %132 = vector.broadcast %cst_30 : f32 to vector<8x256xf32>
    %133 = arith.addf %131, %132 : vector<8x256xf32>
    %134 = math.sqrt %133 : vector<8x256xf32>
    %cst_31 = arith.constant 1.000000e+00 : f32
    %135 = vector.broadcast %cst_31 : f32 to vector<8x256xf32>
    %136 = arith.subf %135, %134 : vector<8x256xf32>
    %cst_32 = arith.constant 0.000000e+00 : f32
    %137 = vector.broadcast %cst_32 : f32 to vector<8x256xf32>
    %138 = arith.maximumf %136, %137 : vector<8x256xf32>
    %139 = arith.fptosi %24 : vector<8x1xf32> to vector<8x1xi32>
    %140 = tpu.iota {dimensions = array<i32: 1>} : vector<1x8xi32>
    %141 = vector.broadcast %139 : vector<8x1xi32> to vector<8x8xi32>
    %142 = vector.broadcast %140 : vector<1x8xi32> to vector<8x8xi32>
    %143 = arith.cmpi eq, %141, %142 : vector<8x8xi32>
    %144 = arith.extui %143 : vector<8x8xi1> to vector<8x8xi32>
    %145 = arith.sitofp %144 : vector<8x8xi32> to vector<8x8xf32>
    %cst_33 = arith.constant dense<0.000000e+00> : vector<8x256xf32>
    %146 = tpu.matmul %145, %1, %cst_33 {dimension_numbers = #tpu.dot_dimension_numbers<[1], [0], [0], [1], [0, 0, 1, 1], [], []>} : vector<8x8xf32>, vector<8x256xf32>, vector<8x256xf32> -> vector<8x256xf32>
    %147 = arith.mulf %138, %138 : vector<8x256xf32>
    %148 = arith.mulf %147, %147 : vector<8x256xf32>
    %149 = arith.mulf %147, %148 : vector<8x256xf32>
    %150 = arith.mulf %146, %149 : vector<8x256xf32>
    %cst_34 = arith.constant 5.000000e-01 : f32
    %151 = vector.broadcast %cst_34 : f32 to vector<8x1xf32>
    %152 = arith.mulf %151, %20 : vector<8x1xf32>
    %153 = arith.mulf %152, %22 : vector<8x1xf32>
    %154 = arith.addf %18, %153 : vector<8x1xf32>
    %cst_35 = arith.constant 5.000000e-01 : f32
    %155 = vector.broadcast %cst_35 : f32 to vector<8x1xf32>
    %156 = arith.mulf %155, %21 : vector<8x1xf32>
    %157 = arith.mulf %156, %23 : vector<8x1xf32>
    %158 = arith.subf %154, %157 : vector<8x1xf32>
    %cst_36 = arith.constant 5.000000e-01 : f32
    %159 = vector.broadcast %cst_36 : f32 to vector<8x1xf32>
    %160 = arith.mulf %159, %20 : vector<8x1xf32>
    %161 = arith.mulf %160, %23 : vector<8x1xf32>
    %162 = arith.addf %19, %161 : vector<8x1xf32>
    %cst_37 = arith.constant 5.000000e-01 : f32
    %163 = vector.broadcast %cst_37 : f32 to vector<8x1xf32>
    %164 = arith.mulf %163, %21 : vector<8x1xf32>
    %165 = arith.mulf %164, %22 : vector<8x1xf32>
    %166 = arith.addf %162, %165 : vector<8x1xf32>
    %cst_38 = arith.constant 0.000000e+00 : f32
    %167 = vector.broadcast %cst_38 : f32 to vector<8x1xf32>
    %168 = arith.subf %167, %20 : vector<8x1xf32>
    %169 = arith.mulf %168, %22 : vector<8x1xf32>
    %cst_39 = arith.constant 0.000000e+00 : f32
    %170 = vector.broadcast %cst_39 : f32 to vector<8x1xf32>
    %171 = arith.subf %170, %20 : vector<8x1xf32>
    %172 = arith.mulf %171, %23 : vector<8x1xf32>
    %173 = arith.mulf %21, %23 : vector<8x1xf32>
    %cst_40 = arith.constant 0.000000e+00 : f32
    %174 = vector.broadcast %cst_40 : f32 to vector<8x1xf32>
    %175 = arith.subf %174, %21 : vector<8x1xf32>
    %176 = arith.mulf %175, %22 : vector<8x1xf32>
    %177 = vector.broadcast %10 : vector<1x256xf32> to vector<8x256xf32>
    %178 = vector.broadcast %158 : vector<8x1xf32> to vector<8x256xf32>
    %179 = arith.subf %177, %178 : vector<8x256xf32>
    %180 = vector.broadcast %11 : vector<1x256xf32> to vector<8x256xf32>
    %181 = vector.broadcast %166 : vector<8x1xf32> to vector<8x256xf32>
    %182 = arith.subf %180, %181 : vector<8x256xf32>
    %183 = arith.mulf %169, %169 : vector<8x1xf32>
    %184 = arith.mulf %172, %172 : vector<8x1xf32>
    %185 = arith.addf %183, %184 : vector<8x1xf32>
    %186 = arith.mulf %173, %173 : vector<8x1xf32>
    %187 = arith.mulf %176, %176 : vector<8x1xf32>
    %188 = arith.addf %186, %187 : vector<8x1xf32>
    %189 = vector.broadcast %169 : vector<8x1xf32> to vector<8x256xf32>
    %190 = arith.mulf %179, %189 : vector<8x256xf32>
    %191 = vector.broadcast %172 : vector<8x1xf32> to vector<8x256xf32>
    %192 = arith.mulf %182, %191 : vector<8x256xf32>
    %193 = arith.addf %190, %192 : vector<8x256xf32>
    %194 = vector.broadcast %173 : vector<8x1xf32> to vector<8x256xf32>
    %195 = arith.mulf %179, %194 : vector<8x256xf32>
    %196 = vector.broadcast %176 : vector<8x1xf32> to vector<8x256xf32>
    %197 = arith.mulf %182, %196 : vector<8x256xf32>
    %198 = arith.addf %195, %197 : vector<8x256xf32>
    %cst_41 = arith.constant 0.000000e+00 : f32
    %199 = vector.broadcast %cst_41 : f32 to vector<8x256xf32>
    %200 = arith.cmpf oge, %193, %199 : vector<8x256xf32>
    %201 = vector.broadcast %185 : vector<8x1xf32> to vector<8x256xf32>
    %202 = arith.cmpf ole, %193, %201 : vector<8x256xf32>
    %203 = arith.andi %200, %202 : vector<8x256xi1>
    %cst_42 = arith.constant 0.000000e+00 : f32
    %204 = vector.broadcast %cst_42 : f32 to vector<8x256xf32>
    %205 = arith.cmpf oge, %198, %204 : vector<8x256xf32>
    %206 = arith.andi %203, %205 : vector<8x256xi1>
    %207 = vector.broadcast %188 : vector<8x1xf32> to vector<8x256xf32>
    %208 = arith.cmpf ole, %198, %207 : vector<8x256xf32>
    %209 = arith.andi %206, %208 : vector<8x256xi1>
    %210 = arith.extui %209 : vector<8x256xi1> to vector<8x256xi32>
    %211 = arith.sitofp %210 : vector<8x256xi32> to vector<8x256xf32>
    %212 = arith.mulf %150, %211 : vector<8x256xf32>
    %213 = tpu.iota {dimensions = array<i32: 1>} : vector<1x256xi32>
    %c255_i32 = arith.constant 255 : i32
    %214 = vector.broadcast %c255_i32 : i32 to vector<1x256xi32>
    %215 = arith.subi %214, %213 : vector<1x256xi32>
    %216 = tpu.bitcast %212 : vector<8x256xf32> -> vector<8x256xi32>
    %c-256_i32 = arith.constant -256 : i32
    %217 = vector.broadcast %c-256_i32 : i32 to vector<8x256xi32>
    %218 = arith.andi %216, %217 : vector<8x256xi32>
    %219 = vector.broadcast %215 : vector<1x256xi32> to vector<8x256xi32>
    %220 = arith.ori %218, %219 : vector<8x256xi32>
    %cst_43 = arith.constant dense<-2147483648> : vector<8xi32>
    %221 = vector.multi_reduction <maxsi>, %220, %cst_43 [1] : vector<8x256xi32> to vector<8xi32>
    %222 = vector.shape_cast %221 : vector<8xi32> to vector<8x1xi32>
    %223 = vector.broadcast %222 : vector<8x1xi32> to vector<8x256xi32>
    %224 = arith.cmpi eq, %220, %223 : vector<8x256xi32>
    %c-2147483648_i32 = arith.constant -2147483648 : i32
    %225 = vector.broadcast %c-2147483648_i32 : i32 to vector<8x256xi32>
    %226 = arith.select %224, %225, %220 : vector<8x256xi1>, vector<8x256xi32>
    %cst_44 = arith.constant dense<-2147483648> : vector<8xi32>
    %227 = vector.multi_reduction <maxsi>, %226, %cst_44 [1] : vector<8x256xi32> to vector<8xi32>
    %228 = vector.shape_cast %227 : vector<8xi32> to vector<8x1xi32>
    %229 = vector.broadcast %228 : vector<8x1xi32> to vector<8x256xi32>
    %230 = arith.cmpi eq, %226, %229 : vector<8x256xi32>
    %c-2147483648_i32_45 = arith.constant -2147483648 : i32
    %231 = vector.broadcast %c-2147483648_i32_45 : i32 to vector<8x256xi32>
    %232 = arith.select %230, %231, %226 : vector<8x256xi1>, vector<8x256xi32>
    %cst_46 = arith.constant dense<-2147483648> : vector<8xi32>
    %233 = vector.multi_reduction <maxsi>, %232, %cst_46 [1] : vector<8x256xi32> to vector<8xi32>
    %234 = vector.shape_cast %233 : vector<8xi32> to vector<8x1xi32>
    %235 = vector.broadcast %234 : vector<8x1xi32> to vector<8x256xi32>
    %236 = arith.cmpi eq, %232, %235 : vector<8x256xi32>
    %c-2147483648_i32_47 = arith.constant -2147483648 : i32
    %237 = vector.broadcast %c-2147483648_i32_47 : i32 to vector<8x256xi32>
    %238 = arith.select %236, %237, %232 : vector<8x256xi1>, vector<8x256xi32>
    %cst_48 = arith.constant dense<-2147483648> : vector<8xi32>
    %239 = vector.multi_reduction <maxsi>, %238, %cst_48 [1] : vector<8x256xi32> to vector<8xi32>
    %240 = vector.shape_cast %239 : vector<8xi32> to vector<8x1xi32>
    %241 = vector.broadcast %240 : vector<8x1xi32> to vector<8x256xi32>
    %242 = arith.cmpi eq, %238, %241 : vector<8x256xi32>
    %c-2147483648_i32_49 = arith.constant -2147483648 : i32
    %243 = vector.broadcast %c-2147483648_i32_49 : i32 to vector<8x256xi32>
    %244 = arith.select %242, %243, %238 : vector<8x256xi1>, vector<8x256xi32>
    %cst_50 = arith.constant dense<-2147483648> : vector<8xi32>
    %245 = vector.multi_reduction <maxsi>, %244, %cst_50 [1] : vector<8x256xi32> to vector<8xi32>
    %246 = vector.shape_cast %245 : vector<8xi32> to vector<8x1xi32>
    %247 = vector.broadcast %246 : vector<8x1xi32> to vector<8x256xi32>
    %248 = arith.cmpi eq, %244, %247 : vector<8x256xi32>
    %c-2147483648_i32_51 = arith.constant -2147483648 : i32
    %249 = vector.broadcast %c-2147483648_i32_51 : i32 to vector<8x256xi32>
    %250 = arith.select %248, %249, %244 : vector<8x256xi1>, vector<8x256xi32>
    %cst_52 = arith.constant dense<-2147483648> : vector<8xi32>
    %251 = vector.multi_reduction <maxsi>, %250, %cst_52 [1] : vector<8x256xi32> to vector<8xi32>
    %252 = vector.shape_cast %251 : vector<8xi32> to vector<8x1xi32>
    %253 = vector.broadcast %252 : vector<8x1xi32> to vector<8x256xi32>
    %254 = arith.cmpi eq, %250, %253 : vector<8x256xi32>
    %c-2147483648_i32_53 = arith.constant -2147483648 : i32
    %255 = vector.broadcast %c-2147483648_i32_53 : i32 to vector<8x256xi32>
    %256 = arith.select %254, %255, %250 : vector<8x256xi1>, vector<8x256xi32>
    %cst_54 = arith.constant dense<-2147483648> : vector<8xi32>
    %257 = vector.multi_reduction <maxsi>, %256, %cst_54 [1] : vector<8x256xi32> to vector<8xi32>
    %258 = vector.shape_cast %257 : vector<8xi32> to vector<8x1xi32>
    %259 = vector.broadcast %258 : vector<8x1xi32> to vector<8x256xi32>
    %260 = arith.cmpi eq, %256, %259 : vector<8x256xi32>
    %c-2147483648_i32_55 = arith.constant -2147483648 : i32
    %261 = vector.broadcast %c-2147483648_i32_55 : i32 to vector<8x256xi32>
    %262 = arith.select %260, %261, %256 : vector<8x256xi1>, vector<8x256xi32>
    %cst_56 = arith.constant dense<-2147483648> : vector<8xi32>
    %263 = vector.multi_reduction <maxsi>, %262, %cst_56 [1] : vector<8x256xi32> to vector<8xi32>
    %264 = vector.shape_cast %263 : vector<8xi32> to vector<8x1xi32>
    %265 = vector.broadcast %264 : vector<8x1xi32> to vector<8x256xi32>
    %266 = arith.cmpi eq, %262, %265 : vector<8x256xi32>
    %c-2147483648_i32_57 = arith.constant -2147483648 : i32
    %267 = vector.broadcast %c-2147483648_i32_57 : i32 to vector<8x256xi32>
    %268 = arith.select %266, %267, %262 : vector<8x256xi1>, vector<8x256xi32>
    %cst_58 = arith.constant dense<-2147483648> : vector<8xi32>
    %269 = vector.multi_reduction <maxsi>, %268, %cst_58 [1] : vector<8x256xi32> to vector<8xi32>
    %270 = vector.shape_cast %269 : vector<8xi32> to vector<8x1xi32>
    %271 = vector.broadcast %270 : vector<8x1xi32> to vector<8x256xi32>
    %272 = arith.cmpi eq, %268, %271 : vector<8x256xi32>
    %c-2147483648_i32_59 = arith.constant -2147483648 : i32
    %273 = vector.broadcast %c-2147483648_i32_59 : i32 to vector<8x256xi32>
    %274 = arith.select %272, %273, %268 : vector<8x256xi1>, vector<8x256xi32>
    %cst_60 = arith.constant dense<-2147483648> : vector<8xi32>
    %275 = vector.multi_reduction <maxsi>, %274, %cst_60 [1] : vector<8x256xi32> to vector<8xi32>
    %276 = vector.shape_cast %275 : vector<8xi32> to vector<8x1xi32>
    %277 = vector.broadcast %276 : vector<8x1xi32> to vector<8x256xi32>
    %278 = arith.cmpi eq, %274, %277 : vector<8x256xi32>
    %c-2147483648_i32_61 = arith.constant -2147483648 : i32
    %279 = vector.broadcast %c-2147483648_i32_61 : i32 to vector<8x256xi32>
    %280 = arith.select %278, %279, %274 : vector<8x256xi1>, vector<8x256xi32>
    %cst_62 = arith.constant dense<-2147483648> : vector<8xi32>
    %281 = vector.multi_reduction <maxsi>, %280, %cst_62 [1] : vector<8x256xi32> to vector<8xi32>
    %282 = vector.shape_cast %281 : vector<8xi32> to vector<8x1xi32>
    %283 = vector.broadcast %282 : vector<8x1xi32> to vector<8x256xi32>
    %284 = arith.cmpi eq, %280, %283 : vector<8x256xi32>
    %c-2147483648_i32_63 = arith.constant -2147483648 : i32
    %285 = vector.broadcast %c-2147483648_i32_63 : i32 to vector<8x256xi32>
    %286 = arith.select %284, %285, %280 : vector<8x256xi1>, vector<8x256xi32>
    %cst_64 = arith.constant dense<-2147483648> : vector<8xi32>
    %287 = vector.multi_reduction <maxsi>, %286, %cst_64 [1] : vector<8x256xi32> to vector<8xi32>
    %288 = vector.shape_cast %287 : vector<8xi32> to vector<8x1xi32>
    %289 = vector.broadcast %288 : vector<8x1xi32> to vector<8x256xi32>
    %290 = arith.cmpi eq, %286, %289 : vector<8x256xi32>
    %c-2147483648_i32_65 = arith.constant -2147483648 : i32
    %291 = vector.broadcast %c-2147483648_i32_65 : i32 to vector<8x256xi32>
    %292 = arith.select %290, %291, %286 : vector<8x256xi1>, vector<8x256xi32>
    %cst_66 = arith.constant dense<-2147483648> : vector<8xi32>
    %293 = vector.multi_reduction <maxsi>, %292, %cst_66 [1] : vector<8x256xi32> to vector<8xi32>
    %294 = vector.shape_cast %293 : vector<8xi32> to vector<8x1xi32>
    %295 = vector.broadcast %294 : vector<8x1xi32> to vector<8x256xi32>
    %296 = arith.cmpi eq, %292, %295 : vector<8x256xi32>
    %c-2147483648_i32_67 = arith.constant -2147483648 : i32
    %297 = vector.broadcast %c-2147483648_i32_67 : i32 to vector<8x256xi32>
    %298 = arith.select %296, %297, %292 : vector<8x256xi1>, vector<8x256xi32>
    %c0_i32 = arith.constant 0 : i32
    %299 = vector.broadcast %c0_i32 : i32 to vector<8x256xi32>
    %300 = arith.cmpi slt, %298, %299 : vector<8x256xi32>
    %301 = arith.extui %300 : vector<8x256xi1> to vector<8x256xi32>
    %302 = arith.sitofp %301 : vector<8x256xi32> to vector<8x256xf32>
    %303 = arith.mulf %302, %211 : vector<8x256xf32>
    %304 = vector.broadcast %25 : vector<8x1xf32> to vector<8x256xf32>
    %305 = arith.mulf %303, %304 : vector<8x256xf32>
    %306 = tpu.iota {dimensions = array<i32: 0>} : vector<8x1xi32>
    %cst_68 = arith.constant dense<0.000000e+00> : vector<256xf32>
    %307 = vector.multi_reduction <add>, %305, %cst_68 [0] : vector<8x256xf32> to vector<256xf32>
    %308 = vector.shape_cast %307 : vector<256xf32> to vector<1x256xf32>
    %cst_69 = arith.constant dense<0xFF800000> : vector<256xf32>
    %309 = vector.multi_reduction <maximumf>, %138, %cst_69 [0] : vector<8x256xf32> to vector<256xf32>
    %310 = vector.shape_cast %309 : vector<256xf32> to vector<1x256xf32>
    %311 = vector.broadcast %310 : vector<1x256xf32> to vector<8x256xf32>
    %312 = arith.cmpf oeq, %138, %311 : vector<8x256xf32>
    %c8_i32 = arith.constant 8 : i32
    %313 = vector.shape_cast %306 : vector<8x1xi32> to vector<8x1xi32>
    %314 = vector.broadcast %313 : vector<8x1xi32> to vector<8x256xi32>
    %315 = vector.broadcast %c8_i32 : i32 to vector<8x256xi32>
    %316 = arith.select %312, %314, %315 : vector<8x256xi1>, vector<8x256xi32>
    %cst_70 = arith.constant dense<2147483647> : vector<256xi32>
    %317 = vector.multi_reduction <minsi>, %316, %cst_70 [0] : vector<8x256xi32> to vector<256xi32>
    %318 = vector.shape_cast %317 : vector<256xi32> to vector<1x256xi32>
    %319 = vector.broadcast %306 : vector<8x1xi32> to vector<8x256xi32>
    %320 = vector.broadcast %318 : vector<1x256xi32> to vector<8x256xi32>
    %321 = arith.cmpi eq, %319, %320 : vector<8x256xi32>
    %322 = arith.extui %321 : vector<8x256xi1> to vector<8x256xi32>
    %323 = arith.sitofp %322 : vector<8x256xi32> to vector<8x256xf32>
    %cst_71 = arith.constant 1.000000e+00 : f32
    %324 = vector.broadcast %cst_71 : f32 to vector<1x256xf32>
    %325 = arith.cmpf ogt, %308, %324 : vector<1x256xf32>
    %326 = vector.shape_cast %325 : vector<1x256xi1> to vector<1x256xi1>
    %327 = vector.broadcast %326 : vector<1x256xi1> to vector<8x256xi1>
    %328 = arith.select %327, %323, %305 : vector<8x256xi1>, vector<8x256xf32>
    %cst_72 = arith.constant dense<0.000000e+00> : vector<256xf32>
    %329 = vector.multi_reduction <add>, %328, %cst_72 [0] : vector<8x256xf32> to vector<256xf32>
    %330 = vector.shape_cast %329 : vector<256xf32> to vector<1x256xf32>
    %cst_73 = arith.constant dense<0xFF800000> : vector<256xf32>
    %331 = vector.multi_reduction <maximumf>, %328, %cst_73 [0] : vector<8x256xf32> to vector<256xf32>
    %332 = vector.shape_cast %331 : vector<256xf32> to vector<1x256xf32>
    %333 = vector.broadcast %332 : vector<1x256xf32> to vector<8x256xf32>
    %334 = arith.cmpf oeq, %328, %333 : vector<8x256xf32>
    %c8_i32_74 = arith.constant 8 : i32
    %335 = vector.shape_cast %306 : vector<8x1xi32> to vector<8x1xi32>
    %336 = vector.broadcast %335 : vector<8x1xi32> to vector<8x256xi32>
    %337 = vector.broadcast %c8_i32_74 : i32 to vector<8x256xi32>
    %338 = arith.select %334, %336, %337 : vector<8x256xi1>, vector<8x256xi32>
    %cst_75 = arith.constant dense<2147483647> : vector<256xi32>
    %339 = vector.multi_reduction <minsi>, %338, %cst_75 [0] : vector<8x256xi32> to vector<256xi32>
    %340 = vector.shape_cast %339 : vector<256xi32> to vector<1x256xi32>
    %341 = vector.broadcast %306 : vector<8x1xi32> to vector<8x256xi32>
    %342 = vector.broadcast %340 : vector<1x256xi32> to vector<8x256xi32>
    %343 = arith.cmpi eq, %341, %342 : vector<8x256xi32>
    %344 = arith.extui %343 : vector<8x256xi1> to vector<8x256xi32>
    %345 = arith.sitofp %344 : vector<8x256xi32> to vector<8x256xf32>
    %cst_76 = arith.constant dense<0.000000e+00> : vector<8x256xf32>
    %346 = tpu.matmul %9, %345, %cst_76 {dimension_numbers = #tpu.dot_dimension_numbers<[1], [0], [0], [1], [0, 0, 1, 1], [], []>} : vector<8x8xf32>, vector<8x256xf32>, vector<8x256xf32> -> vector<8x256xf32>
    %347 = vector.extract_strided_slice %346 {offsets = [5, 0], sizes = [1, 256], strides = [1, 1]} : vector<8x256xf32> to vector<1x256xf32>
    %cst_77 = arith.constant 0.000000e+00 : f32
    %348 = vector.broadcast %cst_77 : f32 to vector<1x256xf32>
    %349 = arith.maximumf %347, %348 : vector<1x256xf32>
    %350 = arith.fptosi %349 : vector<1x256xf32> to vector<1x256xi32>
    %351 = arith.mulf %150, %328 : vector<8x256xf32>
    %cst_78 = arith.constant dense<0xFF800000> : vector<8xf32>
    %352 = vector.multi_reduction <maximumf>, %351, %cst_78 [1] : vector<8x256xf32> to vector<8xf32>
    %353 = vector.shape_cast %352 : vector<8xf32> to vector<8x1xf32>
    %354 = arith.mulf %138, %328 : vector<8x256xf32>
    %cst_79 = arith.constant dense<0xFF800000> : vector<8xf32>
    %355 = vector.multi_reduction <maximumf>, %354, %cst_79 [1] : vector<8x256xf32> to vector<8xf32>
    %356 = vector.shape_cast %355 : vector<8xf32> to vector<8x1xf32>
    %cst_80 = arith.constant 9.99999971E-10 : f32
    %357 = vector.broadcast %cst_80 : f32 to vector<8x1xf32>
    %358 = arith.addf %353, %357 : vector<8x1xf32>
    %359 = arith.divf %356, %358 : vector<8x1xf32>
    %360 = vector.broadcast %359 : vector<8x1xf32> to vector<8x256xf32>
    %361 = arith.mulf %351, %360 : vector<8x256xf32>
    %cst_81 = arith.constant dense<0xFF800000> : vector<256xf32>
    %362 = vector.multi_reduction <maximumf>, %361, %cst_81 [0] : vector<8x256xf32> to vector<256xf32>
    %363 = vector.shape_cast %362 : vector<256xf32> to vector<1x256xf32>
    %c0_82 = arith.constant 0 : index
    %c0_83 = arith.constant 0 : index
    %c0_84 = arith.constant 0 : index
    %364 = vector.load %arg6[%c0_82, %c0_83, %c0_84] : memref<1x1x256xi32, #tpu.memory_space<vmem>>, vector<1x1x256xi32>
    %365 = vector.shape_cast %364 : vector<1x1x256xi32> to vector<1x256xi32>
    %366 = vector.shape_cast %350 : vector<1x256xi32> to vector<1x1x256xi32>
    tpu.vector_store %arg6[%c0_82, %c0_83, %c0_84], %366 {strides = array<i32>} : memref<1x1x256xi32, #tpu.memory_space<vmem>>, vector<1x1x256xi32>,
    %c0_85 = arith.constant 0 : index
    %c0_86 = arith.constant 0 : index
    %c0_87 = arith.constant 0 : index
    %367 = vector.load %arg9[%c0_85, %c0_86, %c0_87] : memref<1x1x256xf32, #tpu.memory_space<vmem>>, vector<1x1x256xf32>
    %368 = vector.shape_cast %367 : vector<1x1x256xf32> to vector<1x256xf32>
    %369 = vector.shape_cast %330 : vector<1x256xf32> to vector<1x1x256xf32>
    tpu.vector_store %arg9[%c0_85, %c0_86, %c0_87], %369 {strides = array<i32>} : memref<1x1x256xf32, #tpu.memory_space<vmem>>, vector<1x1x256xf32>,
    %370 = vector.extract_strided_slice %346 {offsets = [0, 0], sizes = [5, 256], strides = [1, 1]} : vector<8x256xf32> to vector<5x256xf32>
    %c0_88 = arith.constant 0 : index
    %c0_89 = arith.constant 0 : index
    %c0_90 = arith.constant 0 : index
    %371 = vector.load %arg7[%c0_88, %c0_89, %c0_90] : memref<1x5x256xf32, #tpu.memory_space<vmem>>, vector<1x5x256xf32>
    %372 = vector.shape_cast %371 : vector<1x5x256xf32> to vector<5x256xf32>
    %373 = vector.shape_cast %370 : vector<5x256xf32> to vector<1x5x256xf32>
    tpu.vector_store %arg7[%c0_88, %c0_89, %c0_90], %373 {strides = array<i32>} : memref<1x5x256xf32, #tpu.memory_space<vmem>>, vector<1x5x256xf32>,
    %374 = tpu.iota {dimensions = array<i32: 0>} : vector<8x1xi32>
    %375 = vector.broadcast %374 : vector<8x1xi32> to vector<8x256xi32>
    %376 = vector.broadcast %350 : vector<1x256xi32> to vector<8x256xi32>
    %377 = arith.cmpi eq, %375, %376 : vector<8x256xi32>
    %cst_91 = arith.constant 0.000000e+00 : f32
    %378 = vector.broadcast %cst_91 : f32 to vector<1x256xf32>
    %379 = arith.cmpf ogt, %330, %378 : vector<1x256xf32>
    %380 = vector.broadcast %379 : vector<1x256xi1> to vector<8x256xi1>
    %381 = arith.andi %377, %380 : vector<8x256xi1>
    %cst_92 = arith.constant 0.000000e+00 : f32
    %382 = vector.shape_cast %363 : vector<1x256xf32> to vector<1x256xf32>
    %383 = vector.broadcast %382 : vector<1x256xf32> to vector<8x256xf32>
    %384 = vector.broadcast %cst_92 : f32 to vector<8x256xf32>
    %385 = arith.select %381, %383, %384 : vector<8x256xi1>, vector<8x256xf32>
    %c0_93 = arith.constant 0 : index
    %c0_94 = arith.constant 0 : index
    %c0_95 = arith.constant 0 : index
    %386 = vector.load %arg8[%c0_93, %c0_94, %c0_95] : memref<1x8x256xf32, #tpu.memory_space<vmem>>, vector<1x8x256xf32>
    %387 = vector.shape_cast %386 : vector<1x8x256xf32> to vector<8x256xf32>
    %388 = vector.shape_cast %385 : vector<8x256xf32> to vector<1x8x256xf32>
    tpu.vector_store %arg8[%c0_93, %c0_94, %c0_95], %388 {strides = array<i32>} : memref<1x8x256xf32, #tpu.memory_space<vmem>>, vector<1x8x256xf32>,
    return
  }
  func.func @transform_0(%arg0: i32) -> (i32, i32, i32) {
    %c0_i32 = arith.constant 0 : i32
    %c0_i32_0 = arith.constant 0 : i32
    %c0_i32_1 = arith.constant 0 : i32
    return %arg0, %c0_i32, %c0_i32_0 : i32, i32, i32
  }
  func.func @transform_1(%arg0: i32) -> (i32, i32, i32) {
    %c0_i32 = arith.constant 0 : i32
    %c0_i32_0 = arith.constant 0 : i32
    %c0_i32_1 = arith.constant 0 : i32
    return %arg0, %c0_i32, %c0_i32_0 : i32, i32, i32
  }
  func.func @transform_2(%arg0: i32) -> (i32, i32, i32) {
    %c0_i32 = arith.constant 0 : i32
    %c0_i32_0 = arith.constant 0 : i32
    %c0_i32_1 = arith.constant 0 : i32
    %c0_i32_2 = arith.constant 0 : i32
    return %c0_i32, %c0_i32_0, %c0_i32_1 : i32, i32, i32
  }
  func.func @transform_3(%arg0: i32) -> (i32, i32, i32) {
    %c0_i32 = arith.constant 0 : i32
    %c0_i32_0 = arith.constant 0 : i32
    %c0_i32_1 = arith.constant 0 : i32
    return %arg0, %c0_i32, %c0_i32_0 : i32, i32, i32
  }
  func.func @transform_4(%arg0: i32) -> (i32, i32, i32) {
    %c0_i32 = arith.constant 0 : i32
    %c0_i32_0 = arith.constant 0 : i32
    %c0_i32_1 = arith.constant 0 : i32
    return %arg0, %c0_i32, %c0_i32_0 : i32, i32, i32
  }
  func.func @transform_5(%arg0: i32) -> (i32, i32, i32) {
    %c0_i32 = arith.constant 0 : i32
    %c0_i32_0 = arith.constant 0 : i32
    %c0_i32_1 = arith.constant 0 : i32
    return %arg0, %c0_i32, %c0_i32_0 : i32, i32, i32
  }
  func.func @transform_6(%arg0: i32) -> (i32, i32, i32) {
    %c0_i32 = arith.constant 0 : i32
    %c0_i32_0 = arith.constant 0 : i32
    %c0_i32_1 = arith.constant 0 : i32
    return %arg0, %c0_i32, %c0_i32_0 : i32, i32, i32
  }
  func.func @transform_7(%arg0: i32) -> (i32, i32, i32) {
    %c0_i32 = arith.constant 0 : i32
    %c0_i32_0 = arith.constant 0 : i32
    %c0_i32_1 = arith.constant 0 : i32
    return %arg0, %c0_i32, %c0_i32_0 : i32, i32, i32
  }
  func.func @transform_8(%arg0: i32) -> (i32, i32, i32) {
    %c0_i32 = arith.constant 0 : i32
    %c0_i32_0 = arith.constant 0 : i32
    %c0_i32_1 = arith.constant 0 : i32
    return %arg0, %c0_i32, %c0_i32_0 : i32, i32, i32
  }
}

</mosaic_0001>

<llo_original>
// kernel: tpu_custom_call.1
$region0: #{tpu_custom_call.1}
  #allocation0 [shape = 'u32[]', space=smem, size = 0x4, offset = 0x4, fixed_abs, tag = 'smem constant byte address 0x4 - core index']
  #allocation1 [shape = 'u32[144,128]{1,0:T(1,128)}', space=vmem, size = 0x12000, scoped, tag = 'internal scratch']
  %s0 = inlined_call_operand.vmem [shape: f32[2,8,256], index: 0, kind: input, shape index: {}]
  %s1 = inlined_call_operand.vmem [shape: f32[2,6,256], index: 1, kind: input, shape index: {}]
  %s2 = inlined_call_operand.hbm [shape: f32[1,2,256], index: 2, kind: input, shape index: {}]
  %s3 = inlined_call_operand.vmem [shape: f32[2,8,16], index: 3, kind: input, shape index: {}]
  %s4 = inlined_call_operand.vmem [shape: f32[2,8,8], index: 4, kind: input, shape index: {}]
  %s5 = inlined_call_operand.hbm [shape: s32[2,1,256], index: 5, kind: output, shape index: {0}]
  %s6 = inlined_call_operand.vmem [shape: f32[2,5,256], index: 6, kind: output, shape index: {1}]
  %s7 = inlined_call_operand.hbm [shape: f32[2,8,256], index: 7, kind: output, shape index: {2}]
  %s8 = inlined_call_operand.hbm [shape: f32[2,1,256], index: 8, kind: output, shape index: {3}]
  %9 = xla_tuple %s5, %s6, %s7, %s8
  %s10 = sld [smem:[#allocation0]]
  $region81: #{tpu_custom_call.1} parent=0
    _
  %s12 = ssub.s32 1, %s10
  %s13 = scalar_select 0, %s12, %s10
  $region1: #{tpu_custom_call.1} parent=0
    #allocation2 [shape = 'u8[2048]{0}', space=vmem, size = 0x800, scoped, tag = 'input window, operand 2, single buffered']
    #allocation3 [shape = 's32[2]{0}', space=sflag, size = 0x8, scoped, tag = 'scoped memory for tpu_custom_call.1']
    #allocation4 [shape = 's32[2]{0}', space=sflag, size = 0x8, scoped, tag = 'scoped memory for tpu_custom_call.1']
    #allocation5 [shape = 'u8[2048]{0}', space=vmem, size = 0x800, scoped, tag = 'output window, operand 0']
    #allocation6 [shape = 'u8[16384]{0}', space=vmem, size = 0x4000, scoped, tag = 'output window, operand 2']
    #allocation7 [shape = 's32[2]{0}', space=sflag, size = 0x8, scoped, tag = 'scoped memory for tpu_custom_call.1']
    #allocation8 [shape = 'u8[2048]{0}', space=vmem, size = 0x800, scoped, tag = 'output window, operand 3']
    %14 = vsyncpa [#allocation3], 0
    %15 = vsyncpa [#allocation4], 0
    %s16 = scalar_lea.sflag [#allocation4], 1
    %17 = vsyncpa %s16, 0
    %18 = vsyncpa [#allocation7], 0
    %s19 = scalar_lea.sflag [#allocation7], 1
    %20 = vsyncpa %s19, 0
    loop: start=0, step=1, limit=4
    $region2: #{tpu_custom_call.1} parent=1 // loop_pre_header
      _
    $region3: #{tpu_custom_call.1} parent=1 // loop_header
      %s22 = sphi 0, %s26
      %p23 = scmp.ge.s32.totalorder %s22, 4
      %s32 = sphi 0, %s34
      %s35 = sphi 0, %s32
      %s36 = sphi 0, %s35
      %s52 = sphi 0, %s36
      %s58 = sphi 0, %s60
      %s61 = sphi 0, %s58
      %s62 = sphi 0, %s61
      %s78 = sphi 0, %s62
      %s82 = sphi 0, %s82
      %s84 = sphi 0, %s82
      %s85 = sphi 0, %s84
      %s99 = sphi 0, %s85
      %s105 = sphi 0, %s107
      %s108 = sphi 0, %s105
      %s109 = sphi 0, %s108
      %s125 = sphi 0, %s109
      %s131 = sphi 0, %s133
      %s134 = sphi 0, %s131
      %s135 = sphi 0, %s134
      %s151 = sphi 0, %s135
      %s157 = sphi 0, %s159
      %s160 = sphi 0, %s157
      %s161 = sphi 0, %s160
      %s177 = sphi 0, %s161
      %s183 = sphi 0, %s185
      %s186 = sphi 0, %s183
      %s187 = sphi 0, %s186
      %s203 = sphi 0, %s187
      %s209 = sphi 0, %s211
      %s212 = sphi 0, %s209
      %s213 = sphi 0, %s212
      %s229 = sphi 0, %s213
      %s235 = sphi 0, %s237
      %s238 = sphi 0, %s235
      %s239 = sphi 0, %s238
      %s255 = sphi 0, %s239
    $region4: #{tpu_custom_call.1} parent=1 // loop_header_branch
      %25 = sbr.rel (%p23) target = $region8
    $region5: #{tpu_custom_call.1} parent=1 // loop_body
      %s27 = ssub.s32 %s22, 1
      %s28 = ssub.s32 %s22, 2
      %s29 = sadd.s32 %s22, 1
      %s30 = ssub.s32 %s22, %s29
      %p31 = scmp.eq.s32.totalorder %s30, 0
      %s33 = sadd.s32 %s32, 1
      %s34 = scalar_select %p31, %s32, %s33
      %p37 = pneg %p31
      %p38 = scmp.eq.s32.totalorder %s22, 1
      %p39 = por %p37, %p38
      %p40 = scmp.ne.s32.totalorder %s32, %s35
      %p41 = scmp.eq.s32.totalorder %s22, 0
      %p42 = por %p40, %p41
      %p43 = scmp.ne.s32.totalorder %s32, %s35
      %p44 = scmp.eq.s32.totalorder %s27, 1
      %p45 = por %p43, %p44
      %p46 = scmp.ne.s32.totalorder %s35, %s36
      %p47 = scmp.eq.s32.totalorder %s27, 0
      %p48 = por %p46, %p47
      %p49 = scmp.ne.s32.totalorder %s35, %s36
      %p50 = scmp.eq.s32.totalorder %s28, 1
      %p51 = por %p49, %p50
      %p53 = scmp.ne.s32.totalorder %s36, %s52
      %p54 = scmp.eq.s32.totalorder %s28, 0
      %p55 = por %p53, %p54
      %s56 = ssub.s32 %s22, %s29
      %p57 = scmp.eq.s32.totalorder %s56, 0
      %s59 = sadd.s32 %s58, 1
      %s60 = scalar_select %p57, %s58, %s59
      %p63 = pneg %p57
      %p64 = scmp.eq.s32.totalorder %s22, 1
      %p65 = por %p63, %p64
      %p66 = scmp.ne.s32.totalorder %s58, %s61
      %p67 = scmp.eq.s32.totalorder %s22, 0
      %p68 = por %p66, %p67
      %p69 = scmp.ne.s32.totalorder %s58, %s61
      %p70 = scmp.eq.s32.totalorder %s27, 1
      %p71 = por %p69, %p70
      %p72 = scmp.ne.s32.totalorder %s61, %s62
      %p73 = scmp.eq.s32.totalorder %s27, 0
      %p74 = por %p72, %p73
      %p75 = scmp.ne.s32.totalorder %s61, %s62
      %p76 = scmp.eq.s32.totalorder %s28, 1
      %p77 = por %p75, %p76
      %p79 = scmp.ne.s32.totalorder %s62, %s78
      %p80 = scmp.eq.s32.totalorder %s28, 0
      %p81 = por %p79, %p80
      %s83 = sadd.s32 %s82, 1
      %p86 = scmp.eq.s32.totalorder %s22, 1
      %p87 = scmp.ne.s32.totalorder %s82, %s84
      %p88 = scmp.eq.s32.totalorder %s22, 0
      %p89 = por %p87, %p88
      %p90 = scmp.ne.s32.totalorder %s82, %s84
      %p91 = scmp.eq.s32.totalorder %s27, 1
      %p92 = por %p90, %p91
      %p93 = scmp.ne.s32.totalorder %s84, %s85
      %p94 = scmp.eq.s32.totalorder %s27, 0
      %p95 = por %p93, %p94
      %p96 = scmp.ne.s32.totalorder %s84, %s85
      %p97 = scmp.eq.s32.totalorder %s28, 1
      %p98 = por %p96, %p97
      %p100 = scmp.ne.s32.totalorder %s85, %s99
      %p101 = scmp.eq.s32.totalorder %s28, 0
      %p102 = por %p100, %p101
      %s103 = ssub.s32 %s22, %s29
      %p104 = scmp.eq.s32.totalorder %s103, 0
      %s106 = sadd.s32 %s105, 1
      %s107 = scalar_select %p104, %s105, %s106
      %p110 = pneg %p104
      %p111 = scmp.eq.s32.totalorder %s22, 1
      %p112 = por %p110, %p111
      %p113 = scmp.ne.s32.totalorder %s105, %s108
      %p114 = scmp.eq.s32.totalorder %s22, 0
      %p115 = por %p113, %p114
      %p116 = scmp.ne.s32.totalorder %s105, %s108
      %p117 = scmp.eq.s32.totalorder %s27, 1
      %p118 = por %p116, %p117
      %p119 = scmp.ne.s32.totalorder %s108, %s109
      %p120 = scmp.eq.s32.totalorder %s27, 0
      %p121 = por %p119, %p120
      %p122 = scmp.ne.s32.totalorder %s108, %s109
      %p123 = scmp.eq.s32.totalorder %s28, 1
      %p124 = por %p122, %p123
      %p126 = scmp.ne.s32.totalorder %s109, %s125
      %p127 = scmp.eq.s32.totalorder %s28, 0
      %p128 = por %p126, %p127
      %s129 = ssub.s32 %s22, %s29
      %p130 = scmp.eq.s32.totalorder %s129, 0
      %s132 = sadd.s32 %s131, 1
      %s133 = scalar_select %p130, %s131, %s132
      %p136 = pneg %p130
      %p137 = scmp.eq.s32.totalorder %s22, 1
      %p138 = por %p136, %p137
      %p139 = scmp.ne.s32.totalorder %s131, %s134
      %p140 = scmp.eq.s32.totalorder %s22, 0
      %p141 = por %p139, %p140
      %p142 = scmp.ne.s32.totalorder %s131, %s134
      %p143 = scmp.eq.s32.totalorder %s27, 1
      %p144 = por %p142, %p143
      %p145 = scmp.ne.s32.totalorder %s134, %s135
      %p146 = scmp.eq.s32.totalorder %s27, 0
      %p147 = por %p145, %p146
      %p148 = scmp.ne.s32.totalorder %s134, %s135
      %p149 = scmp.eq.s32.totalorder %s28, 1
      %p150 = por %p148, %p149
      %p152 = scmp.ne.s32.totalorder %s135, %s151
      %p153 = scmp.eq.s32.totalorder %s28, 0
      %p154 = por %p152, %p153
      %s155 = ssub.s32 %s22, %s29
      %p156 = scmp.eq.s32.totalorder %s155, 0
      %s158 = sadd.s32 %s157, 1
      %s159 = scalar_select %p156, %s157, %s158
      %p162 = pneg %p156
      %p163 = scmp.eq.s32.totalorder %s22, 1
      %p164 = por %p162, %p163
      %p165 = scmp.ne.s32.totalorder %s157, %s160
      %p166 = scmp.eq.s32.totalorder %s22, 0
      %p167 = por %p165, %p166
      %p168 = scmp.ne.s32.totalorder %s157, %s160
      %p169 = scmp.eq.s32.totalorder %s27, 1
      %p170 = por %p168, %p169
      %p171 = scmp.ne.s32.totalorder %s160, %s161
      %p172 = scmp.eq.s32.totalorder %s27, 0
      %p173 = por %p171, %p172
      %p174 = scmp.ne.s32.totalorder %s160, %s161
      %p175 = scmp.eq.s32.totalorder %s28, 1
      %p176 = por %p174, %p175
      %p178 = scmp.ne.s32.totalorder %s161, %s177
      %p179 = scmp.eq.s32.totalorder %s28, 0
      %p180 = por %p178, %p179
      %s181 = ssub.s32 %s22, %s29
      %p182 = scmp.eq.s32.totalorder %s181, 0
      %s184 = sadd.s32 %s183, 1
      %s185 = scalar_select %p182, %s183, %s184
      %p188 = pneg %p182
      %p189 = scmp.eq.s32.totalorder %s22, 1
      %p190 = por %p188, %p189
      %p191 = scmp.ne.s32.totalorder %s183, %s186
      %p192 = scmp.eq.s32.totalorder %s22, 0
      %p193 = por %p191, %p192
      %p194 = scmp.ne.s32.totalorder %s183, %s186
      %p195 = scmp.eq.s32.totalorder %s27, 1
      %p196 = por %p194, %p195
      %p197 = scmp.ne.s32.totalorder %s186, %s187
      %p198 = scmp.eq.s32.totalorder %s27, 0
      %p199 = por %p197, %p198
      %p200 = scmp.ne.s32.totalorder %s186, %s187
      %p201 = scmp.eq.s32.totalorder %s28, 1
      %p202 = por %p200, %p201
      %p204 = scmp.ne.s32.totalorder %s187, %s203
      %p205 = scmp.eq.s32.totalorder %s28, 0
      %p206 = por %p204, %p205
      %s207 = ssub.s32 %s22, %s29
      %p208 = scmp.eq.s32.totalorder %s207, 0
      %s210 = sadd.s32 %s209, 1
      %s211 = scalar_select %p208, %s209, %s210
      %p214 = pneg %p208
      %p215 = scmp.eq.s32.totalorder %s22, 1
      %p216 = por %p214, %p215
      %p217 = scmp.ne.s32.totalorder %s209, %s212
      %p218 = scmp.eq.s32.totalorder %s22, 0
      %p219 = por %p217, %p218
      %p220 = scmp.ne.s32.totalorder %s209, %s212
      %p221 = scmp.eq.s32.totalorder %s27, 1
      %p222 = por %p220, %p221
      %p223 = scmp.ne.s32.totalorder %s212, %s213
      %p224 = scmp.eq.s32.totalorder %s27, 0
      %p225 = por %p223, %p224
      %p226 = scmp.ne.s32.totalorder %s212, %s213
      %p227 = scmp.eq.s32.totalorder %s28, 1
      %p228 = por %p226, %p227
      %p230 = scmp.ne.s32.totalorder %s213, %s229
      %p231 = scmp.eq.s32.totalorder %s28, 0
      %p232 = por %p230, %p231
      %s233 = ssub.s32 %s22, %s29
      %p234 = scmp.eq.s32.totalorder %s233, 0
      %s236 = sadd.s32 %s235, 1
      %s237 = scalar_select %p234, %s235, %s236
      %p240 = pneg %p234
      %p241 = scmp.eq.s32.totalorder %s22, 1
      %p242 = por %p240, %p241
      %p243 = scmp.ne.s32.totalorder %s235, %s238
      %p244 = scmp.eq.s32.totalorder %s22, 0
      %p245 = por %p243, %p244
      %p246 = scmp.ne.s32.totalorder %s235, %s238
      %p247 = scmp.eq.s32.totalorder %s27, 1
      %p248 = por %p246, %p247
      %p249 = scmp.ne.s32.totalorder %s238, %s239
      %p250 = scmp.eq.s32.totalorder %s27, 0
      %p251 = por %p249, %p250
      %p252 = scmp.ne.s32.totalorder %s238, %s239
      %p253 = scmp.eq.s32.totalorder %s28, 1
      %p254 = por %p252, %p253
      %p256 = scmp.ne.s32.totalorder %s239, %s255
      %p257 = scmp.eq.s32.totalorder %s28, 0
      %p258 = por %p256, %p257
      %p259 = scmp.le.s32.totalorder 1, %s22
      %p260 = scmp.lt.s32.totalorder %s22, 3
      %p261 = pnand %p259, %p260
      %p262 = pneg %p261
      // Predicated region
      $region9: #{tpu_custom_call.1} parent=5 // pred_check
        _
      $region10: #{tpu_custom_call.1} parent=5 // pred_check_branch
        %264 = sbr.rel (%p261) target = $region12
      $region11: #{tpu_custom_call.1} parent=5 // pred_region
        %s265 = ssub.s32 %s22, 1
        // Predicated region
        $region13: #{tpu_custom_call.1} parent=11 // pred_check
          %p266 = pneg %p95
        $region14: #{tpu_custom_call.1} parent=11 // pred_check_branch
          %268 = sbr.rel (%p266) target = $region16
        $region15: #{tpu_custom_call.1} parent=11 // pred_region
          %s270 = ssub.s32 64, 64
          %271 = vsyncadd [#allocation3], %s270
          %s273 = sshll.u32 [#allocation2], 4
          %s274 = int_to_ptr.vmem [resolvable:$true] %s273
          %276 = dma.hbm_to_vmem [thread:$0]  %s2, 64, %s274, [#allocation3]
        $region16: #{tpu_custom_call.1} parent=11 // pred_fallthru
          _
      $region12: #{tpu_custom_call.1} parent=5 // pred_fallthru
        _
      %p277 = scmp.lt.s32.totalorder %s22, 2
      // Predicated region
      $region17: #{tpu_custom_call.1} parent=5 // pred_check
        %p278 = pneg %p277
      $region18: #{tpu_custom_call.1} parent=5 // pred_check_branch
        %280 = sbr.rel (%p278) target = $region20
      $region19: #{tpu_custom_call.1} parent=5 // pred_region
        // Predicated region
        $region21: #{tpu_custom_call.1} parent=19 // pred_check
          %p281 = pneg %p42
        $region22: #{tpu_custom_call.1} parent=19 // pred_check_branch
          %283 = sbr.rel (%p281) target = $region24
        $region23: #{tpu_custom_call.1} parent=19 // pred_region
          %p284 = scmp.lt.s32.totalorder %s22, 1
          %s285 = scalar_select %p284, %s22, 1
          %s286 = smul.addr %s285, 2
          %s287 = smul.addr %s286, 8
          %s288 = scalar_lea.vmem %s0, %s287
        $region24: #{tpu_custom_call.1} parent=19 // pred_fallthru
          _
        // Predicated region
        $region25: #{tpu_custom_call.1} parent=19 // pred_check
          %p289 = pneg %p68
        $region26: #{tpu_custom_call.1} parent=19 // pred_check_branch
          %291 = sbr.rel (%p289) target = $region28
        $region27: #{tpu_custom_call.1} parent=19 // pred_region
          %p292 = scmp.lt.s32.totalorder %s22, 1
          %s293 = scalar_select %p292, %s22, 1
          %s294 = smul.addr %s293, 2
          %s295 = smul.addr %s294, 8
          %s296 = scalar_lea.vmem %s1, %s295
        $region28: #{tpu_custom_call.1} parent=19 // pred_fallthru
          _
        // Predicated region
        $region29: #{tpu_custom_call.1} parent=19 // pred_check
          %p297 = pneg %p115
        $region30: #{tpu_custom_call.1} parent=19 // pred_check_branch
          %299 = sbr.rel (%p297) target = $region32
        $region31: #{tpu_custom_call.1} parent=19 // pred_region
          %p300 = scmp.lt.s32.totalorder %s22, 1
          %s301 = scalar_select %p300, %s22, 1
          %s302 = smul.addr %s301, 8
          %s303 = scalar_lea.vmem %s3, %s302
        $region32: #{tpu_custom_call.1} parent=19 // pred_fallthru
          _
        // Predicated region
        $region33: #{tpu_custom_call.1} parent=19 // pred_check
          %p304 = pneg %p141
        $region34: #{tpu_custom_call.1} parent=19 // pred_check_branch
          %306 = sbr.rel (%p304) target = $region36
        $region35: #{tpu_custom_call.1} parent=19 // pred_region
          %p307 = scmp.lt.s32.totalorder %s22, 1
          %s308 = scalar_select %p307, %s22, 1
          %s309 = smul.addr %s308, 8
          %s310 = scalar_lea.vmem %s4, %s309
        $region36: #{tpu_custom_call.1} parent=19 // pred_fallthru
          _
      $region20: #{tpu_custom_call.1} parent=5 // pred_fallthru
        _
      %p311 = scmp.le.s32.totalorder 1, %s22
      %p312 = scmp.lt.s32.totalorder %s22, 3
      %p313 = pnand %p311, %p312
      %p314 = pneg %p313
      // Predicated region
      $region37: #{tpu_custom_call.1} parent=5 // pred_check
        _
      $region38: #{tpu_custom_call.1} parent=5 // pred_check_branch
        %316 = sbr.rel (%p313) target = $region40
      $region39: #{tpu_custom_call.1} parent=5 // pred_region
        %s317 = ssub.s32 %s22, 1
        // Predicated region
        $region41: #{tpu_custom_call.1} parent=39 // pred_check
          %p318 = pneg %p95
        $region42: #{tpu_custom_call.1} parent=39 // pred_check_branch
          %320 = sbr.rel (%p318) target = $region44
        $region43: #{tpu_custom_call.1} parent=39 // pred_region
          %321 = dma.done [#allocation3], 64
        $region44: #{tpu_custom_call.1} parent=39 // pred_fallthru
          _
        %p322 = scmp.lt.s32.totalorder %s27, 1
        %s323 = scalar_select %p322, %s27, 1
        %s324 = smul.addr %s323, 2
        %s325 = smul.addr %s324, 8
        %s326 = scalar_lea.vmem %s0, %s325
        %p327 = pneg %p48
        %p328 = pneg %p45
        %p329 = scmp.lt.s32.totalorder %s27, 1
        %s330 = scalar_select %p329, %s27, 1
        %s331 = smul.addr %s330, 2
        %s332 = smul.addr %s331, 8
        %s333 = scalar_lea.vmem %s1, %s332
        %p334 = pneg %p74
        %p335 = pneg %p71
        %p336 = pneg %p95
        %p337 = pneg %p92
        %p338 = scmp.lt.s32.totalorder %s27, 1
        %s339 = scalar_select %p338, %s27, 1
        %s340 = smul.addr %s339, 8
        %s341 = scalar_lea.vmem %s3, %s340
        %p342 = pneg %p121
        %p343 = pneg %p118
        %p344 = scmp.lt.s32.totalorder %s27, 1
        %s345 = scalar_select %p344, %s27, 1
        %s346 = smul.addr %s345, 8
        %s347 = scalar_lea.vmem %s4, %s346
        %p348 = pneg %p147
        %p349 = pneg %p144
        %p350 = pneg %p173
        %p351 = pneg %p170
        %s352 = sand.u32 %s160, 1
        %s353 = scalar_lea.sflag [#allocation4], %s352
        %s354 = sand.u32 %s160, 1
        %s355 = smul.addr %s354, 2
        %s356 = scalar_lea.vmem [#allocation5], %s355
        %p357 = pneg %p199
        %p358 = pneg %p196
        %p359 = scmp.lt.s32.totalorder %s27, 1
        %s360 = scalar_select %p359, %s27, 1
        %s361 = smul.addr %s360, 2
        %s362 = smul.addr %s361, 8
        %s363 = scalar_lea.vmem %s6, %s362
        %p364 = pneg %p225
        %p365 = pneg %p222
        %s366 = sand.u32 %s27, 1
        %s367 = scalar_lea.sflag [#allocation7], %s366
        %s368 = sand.u32 %s212, 1
        %s369 = smul.addr %s368, 16
        %s370 = scalar_lea.vmem [#allocation6], %s369
        %p371 = pneg %p251
        %p372 = pneg %p248
        %s373 = sand.u32 %s27, 1
        %s374 = scalar_lea.sflag [#allocation7], %s373
        %s375 = sand.u32 %s238, 1
        %s376 = smul.addr %s375, 2
        %s377 = scalar_lea.vmem [#allocation8], %s376
        %p378 = scmp.lt.s32.totalorder %s27, 1
        %s379 = scalar_select %p378, %s27, 1
        %s380 = smul.addr %s379, 2
        %s381 = smul.addr %s380, 8
        %s382 = scalar_lea.vmem %s0, %s381
        %p383 = scmp.lt.s32.totalorder %s27, 1
        %s384 = scalar_select %p383, %s27, 1
        %s385 = smul.addr %s384, 2
        %s386 = smul.addr %s385, 8
        %s387 = scalar_lea.vmem %s1, %s386
        %p388 = scmp.lt.s32.totalorder %s27, 1
        %s389 = scalar_select %p388, %s27, 1
        %s390 = smul.addr %s389, 8
        %s391 = scalar_lea.vmem %s3, %s390
        %p392 = scmp.lt.s32.totalorder %s27, 1
        %s393 = scalar_select %p392, %s27, 1
        %s394 = smul.addr %s393, 8
        %s395 = scalar_lea.vmem %s4, %s394
        %p396 = scmp.lt.s32.totalorder %s27, 1
        %s397 = scalar_select %p396, %s27, 1
        %s398 = smul.addr %s397, 2
        %s399 = smul.addr %s398, 8
        %s400 = scalar_lea.vmem %s6, %s399
        %v401 = vld [vmem:[%s382] sm:$0xff]
        %v402 = vld [vmem:[%s382 + $0x8] sm:$0xff]
        %v403 = vld [vmem:[%s387] sm:$0x3f]
        %v404 = vld [vmem:[%s387 + $0x8] sm:$0x3f]
        %v405 = vld [vmem:[#allocation2] sm:$0xf]
        %v406 = vld [vmem:[%s391] sm:$0xff]
        %v407 = vld [vmem:[%s395] sm:$0xff]
        %v408 = vmul.f32 %v406, %v406
        %v409 = vmul.f32 %v408, 0.083333336
        %411 = vrot.lane.b32.xlu0 %v406, 125
        %v412 = vpop.permute.xlu0 %411
        %v414 = vmul.f32 %v409, %v412
        %v415 = vmul.f32 %v414, %v412
        %417 = vrot.lane.b32.xlu0 %v415, 127
        %v418 = vpop.permute.xlu0 %417
        %v420 = vadd.f32 %v415, %v418
        %421 = vrot.lane.b32.xlu0 %v406, 124
        %v422 = vpop.permute.xlu0 %421
        %v424 = vmul.f32 %v409, %v422
        %v425 = vmul.f32 %v424, %v422
        %426 = vrot.lane.b32.xlu0 %v406, 126
        %v427 = vpop.permute.xlu0 %426
        %v429 = vmul.f32 %v409, %v427
        %v430 = vmul.f32 %v429, %v427
        %432 = vrot.lane.b32.xlu0 %v430, 127
        %v433 = vpop.permute.xlu0 %432
        %v435 = vadd.f32 %v425, %v433
        %437 = vrot.lane.b32.xlu0 %v409, 127
        %v438 = vpop.permute.xlu0 %437
        %v440 = vsub.f32 %v409, %v438
        %v441 = vmul.f32 %v440, %v412
        %v442 = vmul.f32 %v441, %v422
        %v443 = vmul.f32 %v403, %v403
        %v444 = vmul.f32 %v404, %v404
        %v445 = vmul.f32 %v443, 0.083333336
        %v446 = vmul.f32 %v444, 0.083333336
        %v449 = vrot.slane %v403, 2
        %v450 = vrot.slane %v404, 2
        %v453 = vmul.f32 %v445, %v449
        %v454 = vmul.f32 %v446, %v450
        %v455 = vmul.f32 %v453, %v449
        %v456 = vmul.f32 %v454, %v450
        %v459 = vrot.slane %v455, 1
        %v460 = vrot.slane %v456, 1
        %v463 = vadd.f32 %v455, %v459
        %v464 = vadd.f32 %v456, %v460
        %v465 = vrot.slane %v403, 3
        %v466 = vrot.slane %v404, 3
        %v469 = vmul.f32 %v445, %v465
        %v470 = vmul.f32 %v446, %v466
        %v471 = vmul.f32 %v469, %v465
        %v472 = vmul.f32 %v470, %v466
        %v473 = vrot.slane %v403, 1
        %v474 = vrot.slane %v404, 1
        %v477 = vmul.f32 %v445, %v473
        %v478 = vmul.f32 %v446, %v474
        %v479 = vmul.f32 %v477, %v473
        %v480 = vmul.f32 %v478, %v474
        %v483 = vrot.slane %v479, 1
        %v484 = vrot.slane %v480, 1
        %v487 = vadd.f32 %v471, %v483
        %v488 = vadd.f32 %v472, %v484
        %v491 = vrot.slane %v445, 1
        %v492 = vrot.slane %v446, 1
        %v495 = vsub.f32 %v445, %v491
        %v496 = vsub.f32 %v446, %v492
        %v497 = vmul.f32 %v495, %v449
        %v498 = vmul.f32 %v496, %v450
        %v499 = vmul.f32 %v497, %v465
        %v500 = vmul.f32 %v498, %v466
        %v501 = vlaneseq
        %v502 = vshrl.u32 %v501, 7
        %v503 = vsub.s32 0, %v502
        %v504 = vrot.slane %v403, %v503
        %v505 = vlaneseq
        %v506 = vshrl.u32 %v505, 7
        %v507 = vsub.s32 0, %v506
        %v508 = vrot.slane %v404, %v507
        %509 = vset.pattern.permute.xlu0 0
        %510 = vperm.xlu0 %509, %v406
        %v511 = vpop.permute.xlu0 %510
        %v513 = vsub.f32 %v504, %v511
        %v514 = vsub.f32 %v508, %v511
        %v515 = vlaneseq
        %v516 = vshrl.u32 %v515, 7
        %v517 = vsub.s32 1, %v516
        %v518 = vrot.slane %v403, %v517
        %v519 = vlaneseq
        %v520 = vshrl.u32 %v519, 7
        %v521 = vsub.s32 1, %v520
        %v522 = vrot.slane %v404, %v521
        %523 = vset.pattern.permute.xlu0 1
        %524 = vperm.xlu0 %523, %v406
        %v525 = vpop.permute.xlu0 %524
        %v527 = vsub.f32 %v518, %v525
        %v528 = vsub.f32 %v522, %v525
        %530 = vset.pattern.permute.xlu0 2
        %531 = vperm.xlu0 %530, %v420
        %v532 = vpop.permute.xlu0 %531
        %v534 = vlaneseq
        %v535 = vshrl.u32 %v534, 7
        %v536 = vsub.s32 2, %v535
        %v537 = vrot.slane %v463, %v536
        %v538 = vlaneseq
        %v539 = vshrl.u32 %v538, 7
        %v540 = vsub.s32 2, %v539
        %v541 = vrot.slane %v464, %v540
        %v542 = vadd.f32 %v532, %v537
        %v543 = vadd.f32 %v532, %v541
        %545 = vset.pattern.permute.xlu0 2
        %546 = vperm.xlu0 %545, %v435
        %v547 = vpop.permute.xlu0 %546
        %v549 = vlaneseq
        %v550 = vshrl.u32 %v549, 7
        %v551 = vsub.s32 2, %v550
        %v552 = vrot.slane %v487, %v551
        %v553 = vlaneseq
        %v554 = vshrl.u32 %v553, 7
        %v555 = vsub.s32 2, %v554
        %v556 = vrot.slane %v488, %v555
        %v557 = vadd.f32 %v547, %v552
        %v558 = vadd.f32 %v547, %v556
        %560 = vset.pattern.permute.xlu0 2
        %561 = vperm.xlu0 %560, %v442
        %v562 = vpop.permute.xlu0 %561
        %v564 = vlaneseq
        %v565 = vshrl.u32 %v564, 7
        %v566 = vsub.s32 2, %v565
        %v567 = vrot.slane %v499, %v566
        %v568 = vlaneseq
        %v569 = vshrl.u32 %v568, 7
        %v570 = vsub.s32 2, %v569
        %v571 = vrot.slane %v500, %v570
        %v572 = vadd.f32 %v562, %v567
        %v573 = vadd.f32 %v562, %v571
        %v574 = vmul.f32 %v542, %v557
        %v575 = vmul.f32 %v543, %v558
        %v576 = vmul.f32 %v572, %v572
        %v577 = vmul.f32 %v573, %v573
        %v578 = vsub.f32 %v574, %v576
        %v579 = vsub.f32 %v575, %v577
        %v580 = vadd.f32 %v578, 1e-07
        %v581 = vadd.f32 %v579, 1e-07
        %v582 = vmul.f32 %v542, %v527
        %v583 = vmul.f32 %v543, %v528
        %v584 = vmul.f32 %v582, %v527
        %v585 = vmul.f32 %v583, %v528
        %v586 = vmul.f32 %v557, %v513
        %v587 = vmul.f32 %v558, %v514
        %v588 = vmul.f32 %v586, %v513
        %v589 = vmul.f32 %v587, %v514
        %v590 = vadd.f32 %v584, %v588
        %v591 = vadd.f32 %v585, %v589
        %v592 = vmul.f32 %v590, 0.25
        %v593 = vmul.f32 %v591, 0.25
        %v594 = vmul.f32 %v572, %v513
        %v595 = vmul.f32 %v573, %v514
        %v596 = vmul.f32 %v594, %v527
        %v597 = vmul.f32 %v595, %v528
        %v598 = vmul.f32 %v596, 0.5
        %v599 = vmul.f32 %v597, 0.5
        %v600 = vsub.f32 %v592, %v598
        %v601 = vsub.f32 %v593, %v599
        %v602 = vrcp.pop %v580
        %v603 = vmul.f32 %v600, %v602
        %v604 = vrcp.pop %v581
        %v605 = vmul.f32 %v601, %v604
        %v606 = vmul.f32 %v420, %v435
        %v607 = vmul.f32 %v442, %v442
        %v608 = vsub.f32 %v606, %v607
        %v609 = vmax.f32 %v608, 0.0
        %v610 = vmul.f32 %v463, %v487
        %v611 = vmul.f32 %v464, %v488
        %v612 = vmul.f32 %v499, %v499
        %v613 = vmul.f32 %v500, %v500
        %v614 = vsub.f32 %v610, %v612
        %v615 = vsub.f32 %v611, %v613
        %v616 = vmax.f32 %v614, 0.0
        %v617 = vmax.f32 %v615, 0.0
        %v618 = vrsqrt.pop %v609
        %v619 = vmul.f32 %v609, %v618
        %vm620 = vcmp.eq.f32.partialorder %v609, inf
        %v621 = vsel %vm620, %v609, %v619
        %vm622 = vcmp.eq.f32.partialorder %v609, 0.0
        %v623 = vand.u32 %v609, 2147483648
        %v624 = vsel %vm622, %v623, %v621
        %v625 = vrsqrt.pop %v616
        %v626 = vmul.f32 %v616, %v625
        %vm627 = vcmp.eq.f32.partialorder %v616, inf
        %v628 = vsel %vm627, %v616, %v626
        %vm629 = vcmp.eq.f32.partialorder %v616, 0.0
        %v630 = vand.u32 %v616, 2147483648
        %v631 = vsel %vm629, %v630, %v628
        %v632 = vrsqrt.pop %v617
        %v633 = vmul.f32 %v617, %v632
        %vm634 = vcmp.eq.f32.partialorder %v617, inf
        %v635 = vsel %vm634, %v617, %v633
        %vm636 = vcmp.eq.f32.partialorder %v617, 0.0
        %v637 = vand.u32 %v617, 2147483648
        %v638 = vsel %vm636, %v637, %v635
        %640 = vset.pattern.permute.xlu0 2
        %641 = vperm.xlu0 %640, %v624
        %v642 = vpop.permute.xlu0 %641
        %v644 = vlaneseq
        %v645 = vshrl.u32 %v644, 7
        %v646 = vsub.s32 2, %v645
        %v647 = vrot.slane %v631, %v646
        %v648 = vlaneseq
        %v649 = vshrl.u32 %v648, 7
        %v650 = vsub.s32 2, %v649
        %v651 = vrot.slane %v638, %v650
        %v652 = vmul.f32 %v642, %v647
        %v653 = vmul.f32 %v642, %v651
        %v654 = vmul.f32 %v652, 4.0
        %v655 = vmul.f32 %v653, 4.0
        %v656 = vadd.f32 %v654, 1e-07
        %v657 = vadd.f32 %v655, 1e-07
        %v658 = vrcp.pop %v656
        %v659 = vmul.f32 %v578, %v658
        %v660 = vrcp.pop %v657
        %v661 = vmul.f32 %v579, %v660
        %v662 = vadd.f32 %v659, 1e-07
        %v663 = vadd.f32 %v661, 1e-07
        %v664 = vlog2.pop %v662
        %v665 = vmul.f32 %v664, 0.6931472
        %v666 = vlog2.pop %v663
        %v667 = vmul.f32 %v666, 0.6931472
        %v668 = vmul.f32 %v665, 0.5
        %v669 = vmul.f32 %v667, 0.5
        %v670 = vadd.f32 %v603, %v668
        %v671 = vadd.f32 %v605, %v669
        %v672 = vmax.f32 %v670, 1e-07
        %v673 = vmax.f32 %v671, 1e-07
        %v674 = vmin.f32 %v672, 100.0
        %v675 = vmin.f32 %v673, 100.0
        %v676 = vsub.f32 0.0, %v674
        %v677 = vsub.f32 0.0, %v675
        %v678 = vmul.f32 %v676, 1.442695
        %v679 = vpow.pop %v678
        %v680 = vmul.f32 %v677, 1.442695
        %v681 = vpow.pop %v680
        %v682 = vsub.f32 1.0, %v679
        %v683 = vsub.f32 1.0, %v681
        %v684 = vadd.f32 %v682, 1e-07
        %v685 = vadd.f32 %v683, 1e-07
        %v686 = vrsqrt.pop %v684
        %v687 = vmul.f32 %v684, %v686
        %vm688 = vcmp.eq.f32.partialorder %v684, inf
        %v689 = vsel %vm688, %v684, %v687
        %vm690 = vcmp.eq.f32.partialorder %v684, 0.0
        %v691 = vand.u32 %v684, 2147483648
        %v692 = vsel %vm690, %v691, %v689
        %v693 = vrsqrt.pop %v685
        %v694 = vmul.f32 %v685, %v693
        %vm695 = vcmp.eq.f32.partialorder %v685, inf
        %v696 = vsel %vm695, %v685, %v694
        %vm697 = vcmp.eq.f32.partialorder %v685, 0.0
        %v698 = vand.u32 %v685, 2147483648
        %v699 = vsel %vm697, %v698, %v696
        %v700 = vsub.f32 1.0, %v692
        %v701 = vsub.f32 1.0, %v699
        %v702 = vmax.f32 %v700, 0.0
        %v703 = vmax.f32 %v701, 0.0
        %v704 = vcvt.f32.s32.to.zero.pseudo %v406
        %v705 = vlaneseq
        %v706 = vand.u32 %v705, 127
        %707 = vset.pattern.permute.xlu0 7
        %708 = vperm.xlu0 %707, %v704
        %v709 = vpop.permute.xlu0 %708
        %vm710 = vcmp.eq.s32.totalorder %v709, %v706
        %v711 = vsel %vm710, 1, 0
        %v712 = vcvt.s32.f32 %v711
        %vm713 = vcmask 64512
        %v715 = vsel %vm713, %v712, 0
        %717 = vmatprep.subr.mxu0 %v402
        %718 = vmatpush1.msra.mxu0 %v401
        %719 = vmatprep.subr.mxu0 0.0
        %720 = vmatpush1.msra.mxu0 0.0
        %721 = vmatprep.subr.mxu0 0.0
        %722 = vmatpush1.msra.mxu0 0.0
        %723 = vmatprep.subr.mxu0 0.0
        %724 = vmatpush1.msra.mxu0 0.0
        %725 = vmatprep.subr.mxu0 0.0
        %726 = vmatpush1.msra.mxu0 0.0
        %727 = vmatprep.subr.mxu0 0.0
        %728 = vmatpush1.msra.mxu0 0.0
        %729 = vmatprep.subr.mxu0 0.0
        %730 = vmatpush1.msra.mxu0 0.0
        %731 = vmatprep.subr.mxu0 0.0
        %732 = vmatpush1.msra.mxu0 0.0
        %733 = vmatprep.subr.mxu0 0.0
        %734 = vmatpush1.msra.mxu0 0.0
        %735 = vmatprep.subr.mxu0 0.0
        %736 = vmatpush1.msra.mxu0 0.0
        %737 = vmatprep.subr.mxu0 0.0
        %738 = vmatpush1.msra.mxu0 0.0
        %739 = vmatprep.subr.mxu0 0.0
        %740 = vmatpush1.msra.mxu0 0.0
        %741 = vmatprep.subr.mxu0 0.0
        %742 = vmatpush1.msra.mxu0 0.0
        %743 = vmatprep.subr.mxu0 0.0
        %744 = vmatpush1.msra.mxu0 0.0
        %745 = vmatprep.subr.mxu0 0.0
        %746 = vmatpush1.msra.mxu0 0.0
        %747 = vmatprep.subr.mxu0 0.0
        %748 = vmatpush1.msra.mxu0 0.0
        %749 = vmatprep.subr.mxu0 0.0
        %750 = vmatpush1.msra.mxu0 0.0
        %751 = vmatprep.subr.mxu0 0.0
        %752 = vmatpush1.msra.mxu0 0.0
        %753 = vmatprep.subr.mxu0 0.0
        %754 = vmatpush1.msra.mxu0 0.0
        %755 = vmatprep.subr.mxu0 0.0
        %756 = vmatpush1.msra.mxu0 0.0
        %757 = vmatprep.subr.mxu0 0.0
        %758 = vmatpush1.msra.mxu0 0.0
        %759 = vmatprep.subr.mxu0 0.0
        %760 = vmatpush1.msra.mxu0 0.0
        %761 = vmatprep.subr.mxu0 0.0
        %762 = vmatpush1.msra.mxu0 0.0
        %763 = vmatprep.subr.mxu0 0.0
        %764 = vmatpush1.msra.mxu0 0.0
        %765 = vmatprep.subr.mxu0 0.0
        %766 = vmatpush1.msra.mxu0 0.0
        %767 = vmatprep.subr.mxu0 0.0
        %768 = vmatpush1.msra.mxu0 0.0
        %769 = vmatprep.subr.mxu0 0.0
        %770 = vmatpush1.msra.mxu0 0.0
        %771 = vmatprep.subr.mxu0 0.0
        %772 = vmatpush1.msra.mxu0 0.0
        %773 = vmatprep.subr.mxu0 0.0
        %774 = vmatpush1.msra.mxu0 0.0
        %775 = vmatprep.subr.mxu0 0.0
        %776 = vmatpush1.msra.mxu0 0.0
        %777 = vmatprep.subr.mxu0 0.0
        %778 = vmatpush1.msra.mxu0 0.0
        %779 = vmatprep.subr.mxu0 0.0
        %780 = vmatpush1.msra.mxu0 0.0
        %781 = vmatprep.mubr.f32.mxu0 0.0
        %782 = vmatmul.mubr.f32.gmra.mrb[0].mxu0 %v715
        %v783 = vpop.f32.mrb[0].mxu0
        %v784 = vadd.f32 0.0, %v783
        %v785 = vpop.f32.mrb[0].mxu0
        %v786 = vadd.f32 0.0, %v785
        %787 = vdwg.mxu0
        %v788 = vmul.f32 %v702, %v702
        %v789 = vmul.f32 %v703, %v703
        %v790 = vmul.f32 %v788, %v788
        %v791 = vmul.f32 %v789, %v789
        %v792 = vmul.f32 %v788, %v790
        %v793 = vmul.f32 %v789, %v791
        %v794 = vmul.f32 %v784, %v792
        %v795 = vmul.f32 %v786, %v793
        %v796 = vmul.f32 %v406, 0.5
        %v797 = vmul.f32 %v796, %v412
        %799 = vrot.lane.b32.xlu0 %v797, 126
        %v800 = vpop.permute.xlu0 %799
        %v802 = vadd.f32 %v406, %v800
        %803 = vrot.lane.b32.xlu0 %v797, 125
        %v804 = vpop.permute.xlu0 %803
        %v806 = vsub.f32 %v802, %v804
        %v807 = vmul.f32 %v796, %v422
        %809 = vrot.lane.b32.xlu0 %v807, 127
        %v810 = vpop.permute.xlu0 %809
        %v812 = vadd.f32 %v406, %v810
        %v813 = vmul.f32 %v796, %v427
        %815 = vrot.lane.b32.xlu0 %v813, 126
        %v816 = vpop.permute.xlu0 %815
        %v818 = vadd.f32 %v812, %v816
        %v819 = vsub.f32 0.0, %v406
        %v820 = vmul.f32 %v819, %v412
        %v821 = vmul.f32 %v819, %v422
        %v822 = vmul.f32 %v406, %v412
        %v823 = vmul.f32 %v819, %v427
        %v825 = vlaneseq
        %v826 = vshrl.u32 %v825, 7
        %v827 = vsub.s32 0, %v826
        %v828 = vrot.slane %v405, %v827
        %v829 = vlaneseq
        %v830 = vshrl.u32 %v829, 7
        %v831 = vsub.s32 2, %v830
        %v832 = vrot.slane %v405, %v831
        %v835 = vlaneseq
        %v836 = vshrl.u32 %v835, 7
        %v837 = vsub.s32 0, %v836
        %v838 = vrot.slane %v828, %v837
        %v839 = vlaneseq
        %v840 = vshrl.u32 %v839, 7
        %v841 = vsub.s32 0, %v840
        %v842 = vrot.slane %v832, %v841
        %844 = vset.pattern.permute.xlu0 0
        %845 = vperm.xlu0 %844, %v806
        %v846 = vpop.permute.xlu0 %845
        %v848 = vsub.f32 %v838, %v846
        %v849 = vsub.f32 %v842, %v846
        %v850 = vlaneseq
        %v851 = vshrl.u32 %v850, 7
        %v852 = vsub.s32 1, %v851
        %v853 = vrot.slane %v405, %v852
        %v854 = vlaneseq
        %v855 = vshrl.u32 %v854, 7
        %v856 = vsub.s32 3, %v855
        %v857 = vrot.slane %v405, %v856
        %v860 = vlaneseq
        %v861 = vshrl.u32 %v860, 7
        %v862 = vsub.s32 1, %v861
        %v863 = vrot.slane %v853, %v862
        %v864 = vlaneseq
        %v865 = vshrl.u32 %v864, 7
        %v866 = vsub.s32 1, %v865
        %v867 = vrot.slane %v857, %v866
        %869 = vset.pattern.permute.xlu0 1
        %870 = vperm.xlu0 %869, %v818
        %v871 = vpop.permute.xlu0 %870
        %v873 = vsub.f32 %v863, %v871
        %v874 = vsub.f32 %v867, %v871
        %v875 = vmul.f32 %v820, %v820
        %v876 = vmul.f32 %v821, %v821
        %v877 = vadd.f32 %v875, %v876
        %v878 = vmul.f32 %v822, %v822
        %v879 = vmul.f32 %v823, %v823
        %v880 = vadd.f32 %v878, %v879
        %882 = vset.pattern.permute.xlu0 2
        %883 = vperm.xlu0 %882, %v820
        %v884 = vpop.permute.xlu0 %883
        %v886 = vmul.f32 %v848, %v884
        %v887 = vmul.f32 %v849, %v884
        %889 = vset.pattern.permute.xlu0 2
        %890 = vperm.xlu0 %889, %v821
        %v891 = vpop.permute.xlu0 %890
        %v893 = vmul.f32 %v873, %v891
        %v894 = vmul.f32 %v874, %v891
        %v895 = vadd.f32 %v886, %v893
        %v896 = vadd.f32 %v887, %v894
        %898 = vset.pattern.permute.xlu0 3
        %899 = vperm.xlu0 %898, %v822
        %v900 = vpop.permute.xlu0 %899
        %v902 = vmul.f32 %v848, %v900
        %v903 = vmul.f32 %v849, %v900
        %905 = vset.pattern.permute.xlu0 3
        %906 = vperm.xlu0 %905, %v823
        %v907 = vpop.permute.xlu0 %906
        %v909 = vmul.f32 %v873, %v907
        %v910 = vmul.f32 %v874, %v907
        %v911 = vadd.f32 %v902, %v909
        %v912 = vadd.f32 %v903, %v910
        %vm913 = vcmp.ge.f32.partialorder %v895, 0.0
        %vm914 = vcmp.ge.f32.partialorder %v896, 0.0
        %916 = vset.pattern.permute.xlu0 2
        %917 = vperm.xlu0 %916, %v877
        %v918 = vpop.permute.xlu0 %917
        %vm920 = vcmp.le.f32.partialorder %v895, %v918
        %vm921 = vcmp.le.f32.partialorder %v896, %v918
        %vm922 = vmand %vm913, %vm920
        %vm923 = vmand %vm914, %vm921
        %vm924 = vcmp.ge.f32.partialorder %v911, 0.0
        %vm925 = vcmp.ge.f32.partialorder %v912, 0.0
        %vm926 = vmand %vm922, %vm924
        %vm927 = vmand %vm923, %vm925
        %929 = vset.pattern.permute.xlu0 3
        %930 = vperm.xlu0 %929, %v880
        %v931 = vpop.permute.xlu0 %930
        %vm933 = vcmp.le.f32.partialorder %v911, %v931
        %vm934 = vcmp.le.f32.partialorder %v912, %v931
        %vm935 = vmand %vm926, %vm933
        %vm936 = vmand %vm927, %vm934
        %v937 = vsel %vm935, 1, 0
        %v938 = vsel %vm936, 1, 0
        %v939 = vcvt.s32.f32 %v937
        %v940 = vcvt.s32.f32 %v938
        %v941 = vmul.f32 %v794, %v939
        %v942 = vmul.f32 %v795, %v940
        %v943 = vadd.s32 %v706, 128
        %v944 = vsub.s32 255, %v706
        %v945 = vsub.s32 255, %v943
        %v948 = vand.u32 %v941, 4294967040
        %v949 = vand.u32 %v942, 4294967040
        %v950 = vor.u32 %v948, %v944
        %v951 = vor.u32 %v949, %v945
        %vm952 = vcmp.gt.s32.totalorder %v950, %v951
        %v953 = vsel %vm952, %v950, %v951
        %v954 = vand.u32 %v953, 65535
        %v955 = vshra.s32 %v953, 16
        %v956 = vcvt.s32.f32 %v954
        %v957 = vcvt.s32.f32 %v955
        %958 = vmax.xlane.f32.xlu0 %v957
        %v959 = vpop.xlane.xlu0 %958
        %vm960 = vcmp.eq.f32.partialorder %v957, %v959
        %v961 = vsel %vm960, %v956, -inf
        %962 = vmax.xlane.f32.xlu0 %v961
        %v963 = vpop.xlane.xlu0 %962
        %v964 = vcvt.f32.s32 %v963
        %v965 = vcvt.f32.s32 %v959
        %v966 = vshll.u32 %v965, 16
        %v967 = vadd.s32 %v966, %v964
        %vm968 = vcmp.eq.s32.totalorder %v950, %v967
        %vm969 = vcmp.eq.s32.totalorder %v951, %v967
        %v970 = vsel %vm968, 2147483648, %v950
        %v971 = vsel %vm969, 2147483648, %v951
        %vm972 = vcmp.gt.s32.totalorder %v970, %v971
        %v973 = vsel %vm972, %v970, %v971
        %v974 = vand.u32 %v973, 65535
        %v975 = vshra.s32 %v973, 16
        %v976 = vcvt.s32.f32 %v974
        %v977 = vcvt.s32.f32 %v975
        %978 = vmax.xlane.f32.xlu0 %v977
        %v979 = vpop.xlane.xlu0 %978
        %vm980 = vcmp.eq.f32.partialorder %v977, %v979
        %v981 = vsel %vm980, %v976, -inf
        %982 = vmax.xlane.f32.xlu0 %v981
        %v983 = vpop.xlane.xlu0 %982
        %v984 = vcvt.f32.s32 %v983
        %v985 = vcvt.f32.s32 %v979
        %v986 = vshll.u32 %v985, 16
        %v987 = vadd.s32 %v986, %v984
        %vm988 = vcmp.eq.s32.totalorder %v970, %v987
        %vm989 = vcmp.eq.s32.totalorder %v971, %v987
        %v990 = vsel %vm988, 2147483648, %v970
        %v991 = vsel %vm989, 2147483648, %v971
        %vm992 = vcmp.gt.s32.totalorder %v990, %v991
        %v993 = vsel %vm992, %v990, %v991
        %v994 = vand.u32 %v993, 65535
        %v995 = vshra.s32 %v993, 16
        %v996 = vcvt.s32.f32 %v994
        %v997 = vcvt.s32.f32 %v995
        %998 = vmax.xlane.f32.xlu0 %v997
        %v999 = vpop.xlane.xlu0 %998
        %vm1000 = vcmp.eq.f32.partialorder %v997, %v999
        %v1001 = vsel %vm1000, %v996, -inf
        %1002 = vmax.xlane.f32.xlu0 %v1001
        %v1003 = vpop.xlane.xlu0 %1002
        %v1004 = vcvt.f32.s32 %v1003
        %v1005 = vcvt.f32.s32 %v999
        %v1006 = vshll.u32 %v1005, 16
        %v1007 = vadd.s32 %v1006, %v1004
        %vm1008 = vcmp.eq.s32.totalorder %v990, %v1007
        %vm1009 = vcmp.eq.s32.totalorder %v991, %v1007
        %v1010 = vsel %vm1008, 2147483648, %v990
        %v1011 = vsel %vm1009, 2147483648, %v991
        %vm1012 = vcmp.gt.s32.totalorder %v1010, %v1011
        %v1013 = vsel %vm1012, %v1010, %v1011
        %v1014 = vand.u32 %v1013, 65535
        %v1015 = vshra.s32 %v1013, 16
        %v1016 = vcvt.s32.f32 %v1014
        %v1017 = vcvt.s32.f32 %v1015
        %1018 = vmax.xlane.f32.xlu0 %v1017
        %v1019 = vpop.xlane.xlu0 %1018
        %vm1020 = vcmp.eq.f32.partialorder %v1017, %v1019
        %v1021 = vsel %vm1020, %v1016, -inf
        %1022 = vmax.xlane.f32.xlu0 %v1021
        %v1023 = vpop.xlane.xlu0 %1022
        %v1024 = vcvt.f32.s32 %v1023
        %v1025 = vcvt.f32.s32 %v1019
        %v1026 = vshll.u32 %v1025, 16
        %v1027 = vadd.s32 %v1026, %v1024
        %vm1028 = vcmp.eq.s32.totalorder %v1010, %v1027
        %vm1029 = vcmp.eq.s32.totalorder %v1011, %v1027
        %v1030 = vsel %vm1028, 2147483648, %v1010
        %v1031 = vsel %vm1029, 2147483648, %v1011
        %vm1032 = vcmp.gt.s32.totalorder %v1030, %v1031
        %v1033 = vsel %vm1032, %v1030, %v1031
        %v1034 = vand.u32 %v1033, 65535
        %v1035 = vshra.s32 %v1033, 16
        %v1036 = vcvt.s32.f32 %v1034
        %v1037 = vcvt.s32.f32 %v1035
        %1038 = vmax.xlane.f32.xlu0 %v1037
        %v1039 = vpop.xlane.xlu0 %1038
        %vm1040 = vcmp.eq.f32.partialorder %v1037, %v1039
        %v1041 = vsel %vm1040, %v1036, -inf
        %1042 = vmax.xlane.f32.xlu0 %v1041
        %v1043 = vpop.xlane.xlu0 %1042
        %v1044 = vcvt.f32.s32 %v1043
        %v1045 = vcvt.f32.s32 %v1039
        %v1046 = vshll.u32 %v1045, 16
        %v1047 = vadd.s32 %v1046, %v1044
        %vm1048 = vcmp.eq.s32.totalorder %v1030, %v1047
        %vm1049 = vcmp.eq.s32.totalorder %v1031, %v1047
        %v1050 = vsel %vm1048, 2147483648, %v1030
        %v1051 = vsel %vm1049, 2147483648, %v1031
        %vm1052 = vcmp.gt.s32.totalorder %v1050, %v1051
        %v1053 = vsel %vm1052, %v1050, %v1051
        %v1054 = vand.u32 %v1053, 65535
        %v1055 = vshra.s32 %v1053, 16
        %v1056 = vcvt.s32.f32 %v1054
        %v1057 = vcvt.s32.f32 %v1055
        %1058 = vmax.xlane.f32.xlu0 %v1057
        %v1059 = vpop.xlane.xlu0 %1058
        %vm1060 = vcmp.eq.f32.partialorder %v1057, %v1059
        %v1061 = vsel %vm1060, %v1056, -inf
        %1062 = vmax.xlane.f32.xlu0 %v1061
        %v1063 = vpop.xlane.xlu0 %1062
        %v1064 = vcvt.f32.s32 %v1063
        %v1065 = vcvt.f32.s32 %v1059
        %v1066 = vshll.u32 %v1065, 16
        %v1067 = vadd.s32 %v1066, %v1064
        %vm1068 = vcmp.eq.s32.totalorder %v1050, %v1067
        %vm1069 = vcmp.eq.s32.totalorder %v1051, %v1067
        %v1070 = vsel %vm1068, 2147483648, %v1050
        %v1071 = vsel %vm1069, 2147483648, %v1051
        %vm1072 = vcmp.gt.s32.totalorder %v1070, %v1071
        %v1073 = vsel %vm1072, %v1070, %v1071
        %v1074 = vand.u32 %v1073, 65535
        %v1075 = vshra.s32 %v1073, 16
        %v1076 = vcvt.s32.f32 %v1074
        %v1077 = vcvt.s32.f32 %v1075
        %1078 = vmax.xlane.f32.xlu0 %v1077
        %v1079 = vpop.xlane.xlu0 %1078
        %vm1080 = vcmp.eq.f32.partialorder %v1077, %v1079
        %v1081 = vsel %vm1080, %v1076, -inf
        %1082 = vmax.xlane.f32.xlu0 %v1081
        %v1083 = vpop.xlane.xlu0 %1082
        %v1084 = vcvt.f32.s32 %v1083
        %v1085 = vcvt.f32.s32 %v1079
        %v1086 = vshll.u32 %v1085, 16
        %v1087 = vadd.s32 %v1086, %v1084
        %vm1088 = vcmp.eq.s32.totalorder %v1070, %v1087
        %vm1089 = vcmp.eq.s32.totalorder %v1071, %v1087
        %v1090 = vsel %vm1088, 2147483648, %v1070
        %v1091 = vsel %vm1089, 2147483648, %v1071
        %vm1092 = vcmp.gt.s32.totalorder %v1090, %v1091
        %v1093 = vsel %vm1092, %v1090, %v1091
        %v1094 = vand.u32 %v1093, 65535
        %v1095 = vshra.s32 %v1093, 16
        %v1096 = vcvt.s32.f32 %v1094
        %v1097 = vcvt.s32.f32 %v1095
        %1098 = vmax.xlane.f32.xlu0 %v1097
        %v1099 = vpop.xlane.xlu0 %1098
        %vm1100 = vcmp.eq.f32.partialorder %v1097, %v1099
        %v1101 = vsel %vm1100, %v1096, -inf
        %1102 = vmax.xlane.f32.xlu0 %v1101
        %v1103 = vpop.xlane.xlu0 %1102
        %v1104 = vcvt.f32.s32 %v1103
        %v1105 = vcvt.f32.s32 %v1099
        %v1106 = vshll.u32 %v1105, 16
        %v1107 = vadd.s32 %v1106, %v1104
        %vm1108 = vcmp.eq.s32.totalorder %v1090, %v1107
        %vm1109 = vcmp.eq.s32.totalorder %v1091, %v1107
        %v1110 = vsel %vm1108, 2147483648, %v1090
        %v1111 = vsel %vm1109, 2147483648, %v1091
        %vm1112 = vcmp.gt.s32.totalorder %v1110, %v1111
        %v1113 = vsel %vm1112, %v1110, %v1111
        %v1114 = vand.u32 %v1113, 65535
        %v1115 = vshra.s32 %v1113, 16
        %v1116 = vcvt.s32.f32 %v1114
        %v1117 = vcvt.s32.f32 %v1115
        %1118 = vmax.xlane.f32.xlu0 %v1117
        %v1119 = vpop.xlane.xlu0 %1118
        %vm1120 = vcmp.eq.f32.partialorder %v1117, %v1119
        %v1121 = vsel %vm1120, %v1116, -inf
        %1122 = vmax.xlane.f32.xlu0 %v1121
        %v1123 = vpop.xlane.xlu0 %1122
        %v1124 = vcvt.f32.s32 %v1123
        %v1125 = vcvt.f32.s32 %v1119
        %v1126 = vshll.u32 %v1125, 16
        %v1127 = vadd.s32 %v1126, %v1124
        %vm1128 = vcmp.eq.s32.totalorder %v1110, %v1127
        %vm1129 = vcmp.eq.s32.totalorder %v1111, %v1127
        %v1130 = vsel %vm1128, 2147483648, %v1110
        %v1131 = vsel %vm1129, 2147483648, %v1111
        %vm1132 = vcmp.gt.s32.totalorder %v1130, %v1131
        %v1133 = vsel %vm1132, %v1130, %v1131
        %v1134 = vand.u32 %v1133, 65535
        %v1135 = vshra.s32 %v1133, 16
        %v1136 = vcvt.s32.f32 %v1134
        %v1137 = vcvt.s32.f32 %v1135
        %1138 = vmax.xlane.f32.xlu0 %v1137
        %v1139 = vpop.xlane.xlu0 %1138
        %vm1140 = vcmp.eq.f32.partialorder %v1137, %v1139
        %v1141 = vsel %vm1140, %v1136, -inf
        %1142 = vmax.xlane.f32.xlu0 %v1141
        %v1143 = vpop.xlane.xlu0 %1142
        %v1144 = vcvt.f32.s32 %v1143
        %v1145 = vcvt.f32.s32 %v1139
        %v1146 = vshll.u32 %v1145, 16
        %v1147 = vadd.s32 %v1146, %v1144
        %vm1148 = vcmp.eq.s32.totalorder %v1130, %v1147
        %vm1149 = vcmp.eq.s32.totalorder %v1131, %v1147
        %v1150 = vsel %vm1148, 2147483648, %v1130
        %v1151 = vsel %vm1149, 2147483648, %v1131
        %vm1152 = vcmp.gt.s32.totalorder %v1150, %v1151
        %v1153 = vsel %vm1152, %v1150, %v1151
        %v1154 = vand.u32 %v1153, 65535
        %v1155 = vshra.s32 %v1153, 16
        %v1156 = vcvt.s32.f32 %v1154
        %v1157 = vcvt.s32.f32 %v1155
        %1158 = vmax.xlane.f32.xlu0 %v1157
        %v1159 = vpop.xlane.xlu0 %1158
        %vm1160 = vcmp.eq.f32.partialorder %v1157, %v1159
        %v1161 = vsel %vm1160, %v1156, -inf
        %1162 = vmax.xlane.f32.xlu0 %v1161
        %v1163 = vpop.xlane.xlu0 %1162
        %v1164 = vcvt.f32.s32 %v1163
        %v1165 = vcvt.f32.s32 %v1159
        %v1166 = vshll.u32 %v1165, 16
        %v1167 = vadd.s32 %v1166, %v1164
        %vm1168 = vcmp.eq.s32.totalorder %v1150, %v1167
        %vm1169 = vcmp.eq.s32.totalorder %v1151, %v1167
        %v1170 = vsel %vm1168, 2147483648, %v1150
        %v1171 = vsel %vm1169, 2147483648, %v1151
        %vm1172 = vcmp.gt.s32.totalorder %v1170, %v1171
        %v1173 = vsel %vm1172, %v1170, %v1171
        %v1174 = vand.u32 %v1173, 65535
        %v1175 = vshra.s32 %v1173, 16
        %v1176 = vcvt.s32.f32 %v1174
        %v1177 = vcvt.s32.f32 %v1175
        %1178 = vmax.xlane.f32.xlu0 %v1177
        %v1179 = vpop.xlane.xlu0 %1178
        %vm1180 = vcmp.eq.f32.partialorder %v1177, %v1179
        %v1181 = vsel %vm1180, %v1176, -inf
        %1182 = vmax.xlane.f32.xlu0 %v1181
        %v1183 = vpop.xlane.xlu0 %1182
        %v1184 = vcvt.f32.s32 %v1183
        %v1185 = vcvt.f32.s32 %v1179
        %v1186 = vshll.u32 %v1185, 16
        %v1187 = vadd.s32 %v1186, %v1184
        %vm1188 = vcmp.eq.s32.totalorder %v1170, %v1187
        %vm1189 = vcmp.eq.s32.totalorder %v1171, %v1187
        %v1190 = vsel %vm1188, 2147483648, %v1170
        %v1191 = vsel %vm1189, 2147483648, %v1171
        %vm1192 = vcmp.gt.s32.totalorder %v1190, %v1191
        %v1193 = vsel %vm1192, %v1190, %v1191
        %v1194 = vand.u32 %v1193, 65535
        %v1195 = vshra.s32 %v1193, 16
        %v1196 = vcvt.s32.f32 %v1194
        %v1197 = vcvt.s32.f32 %v1195
        %1198 = vmax.xlane.f32.xlu0 %v1197
        %v1199 = vpop.xlane.xlu0 %1198
        %vm1200 = vcmp.eq.f32.partialorder %v1197, %v1199
        %v1201 = vsel %vm1200, %v1196, -inf
        %1202 = vmax.xlane.f32.xlu0 %v1201
        %v1203 = vpop.xlane.xlu0 %1202
        %v1204 = vcvt.f32.s32 %v1203
        %v1205 = vcvt.f32.s32 %v1199
        %v1206 = vshll.u32 %v1205, 16
        %v1207 = vadd.s32 %v1206, %v1204
        %vm1208 = vcmp.eq.s32.totalorder %v1190, %v1207
        %vm1209 = vcmp.eq.s32.totalorder %v1191, %v1207
        %v1210 = vsel %vm1208, 2147483648, %v1190
        %v1211 = vsel %vm1209, 2147483648, %v1191
        %vm1212 = vcmp.lt.s32.totalorder %v1210, 0
        %vm1213 = vcmp.lt.s32.totalorder %v1211, 0
        %v1214 = vsel %vm1212, 1, 0
        %v1215 = vsel %vm1213, 1, 0
        %v1216 = vcvt.s32.f32 %v1214
        %v1217 = vcvt.s32.f32 %v1215
        %v1218 = vmul.f32 %v1216, %v939
        %v1219 = vmul.f32 %v1217, %v940
        %1220 = vset.pattern.permute.xlu0 8
        %1221 = vperm.xlu0 %1220, %v406
        %v1222 = vpop.permute.xlu0 %1221
        %v1224 = vmul.f32 %v1218, %v1222
        %v1225 = vmul.f32 %v1219, %v1222
        %v1226 = vlaneseq
        %v1227 = vshrl.u32 %v1226, 7
        %v1228 = vrot.slane %v1224, 4
        %v1229 = vadd.f32 %v1224, %v1228
        %v1230 = vrot.slane %v1229, 2
        %v1231 = vadd.f32 %v1229, %v1230
        %v1232 = vrot.slane %v1231, 1
        %v1233 = vadd.f32 %v1231, %v1232
        %v1234 = vrot.slane %v1225, 4
        %v1235 = vadd.f32 %v1225, %v1234
        %v1236 = vrot.slane %v1235, 2
        %v1237 = vadd.f32 %v1235, %v1236
        %v1238 = vrot.slane %v1237, 1
        %v1239 = vadd.f32 %v1237, %v1238
        %v1240 = vrot.slane %v702, 4
        %v1241 = vmax.f32 %v702, %v1240
        %v1242 = vrot.slane %v1241, 2
        %v1243 = vmax.f32 %v1241, %v1242
        %v1244 = vrot.slane %v1243, 1
        %v1245 = vmax.f32 %v1243, %v1244
        %v1246 = vrot.slane %v703, 4
        %v1247 = vmax.f32 %v703, %v1246
        %v1248 = vrot.slane %v1247, 2
        %v1249 = vmax.f32 %v1247, %v1248
        %v1250 = vrot.slane %v1249, 1
        %v1251 = vmax.f32 %v1249, %v1250
        %vm1252 = vcmp.eq.f32.partialorder %v702, %v1245
        %vm1253 = vcmp.eq.f32.partialorder %v703, %v1251
        %v1254 = vsel %vm1252, %v1227, 8
        %v1255 = vsel %vm1253, %v1227, 8
        %v1256 = vrot.slane %v1254, 4
        %vm1257 = vcmp.lt.s32.totalorder %v1254, %v1256
        %v1258 = vsel %vm1257, %v1254, %v1256
        %v1259 = vrot.slane %v1258, 2
        %vm1260 = vcmp.lt.s32.totalorder %v1258, %v1259
        %v1261 = vsel %vm1260, %v1258, %v1259
        %v1262 = vrot.slane %v1261, 1
        %vm1263 = vcmp.lt.s32.totalorder %v1261, %v1262
        %v1264 = vsel %vm1263, %v1261, %v1262
        %v1265 = vrot.slane %v1255, 4
        %vm1266 = vcmp.lt.s32.totalorder %v1255, %v1265
        %v1267 = vsel %vm1266, %v1255, %v1265
        %v1268 = vrot.slane %v1267, 2
        %vm1269 = vcmp.lt.s32.totalorder %v1267, %v1268
        %v1270 = vsel %vm1269, %v1267, %v1268
        %v1271 = vrot.slane %v1270, 1
        %vm1272 = vcmp.lt.s32.totalorder %v1270, %v1271
        %v1273 = vsel %vm1272, %v1270, %v1271
        %vm1274 = vcmp.eq.s32.totalorder %v1227, %v1264
        %vm1275 = vcmp.eq.s32.totalorder %v1227, %v1273
        %v1276 = vsel %vm1274, 1, 0
        %v1277 = vsel %vm1275, 1, 0
        %v1278 = vcvt.s32.f32 %v1276
        %v1279 = vcvt.s32.f32 %v1277
        %vm1280 = vcmp.gt.f32.partialorder %v1233, 1.0
        %vm1281 = vcmp.gt.f32.partialorder %v1239, 1.0
        %v1282 = vsel %vm1280, 1, 0
        %v1283 = vsel %vm1281, 1, 0
        %vm1284 = vcmp.eq.s32.totalorder %v1282, 1
        %vm1285 = vcmp.eq.s32.totalorder %v1283, 1
        %v1286 = vsel %vm1284, %v1278, %v1224
        %v1287 = vsel %vm1285, %v1279, %v1225
        %v1288 = vrot.slane %v1286, 4
        %v1289 = vadd.f32 %v1286, %v1288
        %v1290 = vrot.slane %v1289, 2
        %v1291 = vadd.f32 %v1289, %v1290
        %v1292 = vrot.slane %v1291, 1
        %v1293 = vadd.f32 %v1291, %v1292
        %v1294 = vrot.slane %v1287, 4
        %v1295 = vadd.f32 %v1287, %v1294
        %v1296 = vrot.slane %v1295, 2
        %v1297 = vadd.f32 %v1295, %v1296
        %v1298 = vrot.slane %v1297, 1
        %v1299 = vadd.f32 %v1297, %v1298
        %v1300 = vrot.slane %v1286, 4
        %v1301 = vmax.f32 %v1286, %v1300
        %v1302 = vrot.slane %v1301, 2
        %v1303 = vmax.f32 %v1301, %v1302
        %v1304 = vrot.slane %v1303, 1
        %v1305 = vmax.f32 %v1303, %v1304
        %v1306 = vrot.slane %v1287, 4
        %v1307 = vmax.f32 %v1287, %v1306
        %v1308 = vrot.slane %v1307, 2
        %v1309 = vmax.f32 %v1307, %v1308
        %v1310 = vrot.slane %v1309, 1
        %v1311 = vmax.f32 %v1309, %v1310
        %vm1312 = vcmp.eq.f32.partialorder %v1286, %v1305
        %vm1313 = vcmp.eq.f32.partialorder %v1287, %v1311
        %v1314 = vsel %vm1312, %v1227, 8
        %v1315 = vsel %vm1313, %v1227, 8
        %v1316 = vrot.slane %v1314, 4
        %vm1317 = vcmp.lt.s32.totalorder %v1314, %v1316
        %v1318 = vsel %vm1317, %v1314, %v1316
        %v1319 = vrot.slane %v1318, 2
        %vm1320 = vcmp.lt.s32.totalorder %v1318, %v1319
        %v1321 = vsel %vm1320, %v1318, %v1319
        %v1322 = vrot.slane %v1321, 1
        %vm1323 = vcmp.lt.s32.totalorder %v1321, %v1322
        %v1324 = vsel %vm1323, %v1321, %v1322
        %v1325 = vrot.slane %v1315, 4
        %vm1326 = vcmp.lt.s32.totalorder %v1315, %v1325
        %v1327 = vsel %vm1326, %v1315, %v1325
        %v1328 = vrot.slane %v1327, 2
        %vm1329 = vcmp.lt.s32.totalorder %v1327, %v1328
        %v1330 = vsel %vm1329, %v1327, %v1328
        %v1331 = vrot.slane %v1330, 1
        %vm1332 = vcmp.lt.s32.totalorder %v1330, %v1331
        %v1333 = vsel %vm1332, %v1330, %v1331
        %vm1334 = vcmp.eq.s32.totalorder %v1227, %v1324
        %vm1335 = vcmp.eq.s32.totalorder %v1227, %v1333
        %v1336 = vsel %vm1334, 1, 0
        %v1337 = vsel %vm1335, 1, 0
        %v1338 = vcvt.s32.f32 %v1336
        %v1339 = vcvt.s32.f32 %v1337
        %v1341 = vsel %vm713, %v407, 0
        %1343 = vmatprep.subr.mxu0 %v1339
        %1344 = vmatpush1.msra.mxu0 %v1338
        %1345 = vmatprep.subr.mxu0 0.0
        %1346 = vmatpush1.msra.mxu0 0.0
        %1347 = vmatprep.subr.mxu0 0.0
        %1348 = vmatpush1.msra.mxu0 0.0
        %1349 = vmatprep.subr.mxu0 0.0
        %1350 = vmatpush1.msra.mxu0 0.0
        %1351 = vmatprep.subr.mxu0 0.0
        %1352 = vmatpush1.msra.mxu0 0.0
        %1353 = vmatprep.subr.mxu0 0.0
        %1354 = vmatpush1.msra.mxu0 0.0
        %1355 = vmatprep.subr.mxu0 0.0
        %1356 = vmatpush1.msra.mxu0 0.0
        %1357 = vmatprep.subr.mxu0 0.0
        %1358 = vmatpush1.msra.mxu0 0.0
        %1359 = vmatprep.subr.mxu0 0.0
        %1360 = vmatpush1.msra.mxu0 0.0
        %1361 = vmatprep.subr.mxu0 0.0
        %1362 = vmatpush1.msra.mxu0 0.0
        %1363 = vmatprep.subr.mxu0 0.0
        %1364 = vmatpush1.msra.mxu0 0.0
        %1365 = vmatprep.subr.mxu0 0.0
        %1366 = vmatpush1.msra.mxu0 0.0
        %1367 = vmatprep.subr.mxu0 0.0
        %1368 = vmatpush1.msra.mxu0 0.0
        %1369 = vmatprep.subr.mxu0 0.0
        %1370 = vmatpush1.msra.mxu0 0.0
        %1371 = vmatprep.subr.mxu0 0.0
        %1372 = vmatpush1.msra.mxu0 0.0
        %1373 = vmatprep.subr.mxu0 0.0
        %1374 = vmatpush1.msra.mxu0 0.0
        %1375 = vmatprep.subr.mxu0 0.0
        %1376 = vmatpush1.msra.mxu0 0.0
        %1377 = vmatprep.subr.mxu0 0.0
        %1378 = vmatpush1.msra.mxu0 0.0
        %1379 = vmatprep.subr.mxu0 0.0
        %1380 = vmatpush1.msra.mxu0 0.0
        %1381 = vmatprep.subr.mxu0 0.0
        %1382 = vmatpush1.msra.mxu0 0.0
        %1383 = vmatprep.subr.mxu0 0.0
        %1384 = vmatpush1.msra.mxu0 0.0
        %1385 = vmatprep.subr.mxu0 0.0
        %1386 = vmatpush1.msra.mxu0 0.0
        %1387 = vmatprep.subr.mxu0 0.0
        %1388 = vmatpush1.msra.mxu0 0.0
        %1389 = vmatprep.subr.mxu0 0.0
        %1390 = vmatpush1.msra.mxu0 0.0
        %1391 = vmatprep.subr.mxu0 0.0
        %1392 = vmatpush1.msra.mxu0 0.0
        %1393 = vmatprep.subr.mxu0 0.0
        %1394 = vmatpush1.msra.mxu0 0.0
        %1395 = vmatprep.subr.mxu0 0.0
        %1396 = vmatpush1.msra.mxu0 0.0
        %1397 = vmatprep.subr.mxu0 0.0
        %1398 = vmatpush1.msra.mxu0 0.0
        %1399 = vmatprep.subr.mxu0 0.0
        %1400 = vmatpush1.msra.mxu0 0.0
        %1401 = vmatprep.subr.mxu0 0.0
        %1402 = vmatpush1.msra.mxu0 0.0
        %1403 = vmatprep.subr.mxu0 0.0
        %1404 = vmatpush1.msra.mxu0 0.0
        %1405 = vmatprep.subr.mxu0 0.0
        %1406 = vmatpush1.msra.mxu0 0.0
        %1407 = vmatprep.mubr.f32.mxu0 0.0
        %1408 = vmatmul.mubr.f32.gmra.mrb[0].mxu0 %v1341
        %v1409 = vpop.f32.mrb[0].mxu0
        %v1410 = vadd.f32 0.0, %v1409
        %v1411 = vpop.f32.mrb[0].mxu0
        %v1412 = vadd.f32 0.0, %v1411
        %1413 = vdwg.mxu0
        %v1414 = vmax.f32 %v1410, 0.0
        %v1415 = vmax.f32 %v1412, 0.0
        %v1416 = vcvt.f32.s32.to.zero.pseudo %v1414
        %v1417 = vcvt.f32.s32.to.zero.pseudo %v1415
        %v1418 = vmul.f32 %v794, %v1286
        %v1419 = vmul.f32 %v795, %v1287
        %v1420 = vmax.f32 %v1418, %v1419
        %1421 = vmax.xlane.f32.xlu0 %v1420
        %v1422 = vpop.xlane.xlu0 %1421
        %v1423 = vmul.f32 %v702, %v1286
        %v1424 = vmul.f32 %v703, %v1287
        %v1425 = vmax.f32 %v1423, %v1424
        %1426 = vmax.xlane.f32.xlu0 %v1425
        %v1427 = vpop.xlane.xlu0 %1426
        %v1428 = vadd.f32 %v1422, 1e-09
        %v1429 = vrcp.pop %v1428
        %v1430 = vmul.f32 %v1427, %v1429
        %v1431 = vmul.f32 %v1418, %v1430
        %v1432 = vmul.f32 %v1419, %v1430
        %v1433 = vrot.slane %v1431, 4
        %v1434 = vmax.f32 %v1431, %v1433
        %v1435 = vrot.slane %v1434, 2
        %v1436 = vmax.f32 %v1434, %v1435
        %v1437 = vrot.slane %v1436, 1
        %v1438 = vmax.f32 %v1436, %v1437
        %v1439 = vrot.slane %v1432, 4
        %v1440 = vmax.f32 %v1432, %v1439
        %v1441 = vrot.slane %v1440, 2
        %v1442 = vmax.f32 %v1440, %v1441
        %v1443 = vrot.slane %v1442, 1
        %v1444 = vmax.f32 %v1442, %v1443
        %v1445 = vcombine.high %v1416, %v1417
        %v1447 = vunpack.c.l.s4 1966171168
        %v1448 = vunpack.c.0.s8 %v1447
        %v1449 = vlaneseq
        %v1450 = vshrl.u32 %v1449, 7
        %v1451 = vsub.s32 %v1448, %v1450
        %v1452 = vrot.slane %v1445, %v1451
        %v1453 = vcombine.high %v1452, %v1452
        %v1455 = vunpack.c.l.s4 1966171168
        %v1456 = vunpack.c.0.s8 %v1455
        %v1457 = vlaneseq
        %v1458 = vshrl.u32 %v1457, 7
        %v1459 = vsub.s32 %v1456, %v1458
        %v1460 = vrot.slane %v1453, %v1459
        %v1461 = vlaneseq
        %vm1462 = vcmp.ge.s32.totalorder %v1461, 0
        %vm1463 = vcmp.lt.s32.totalorder %v1461, 256
        %vm1464 = vmand %vm1462, %vm1463
        %1465 = vst.msk [vmem:[%s356] sm:$0x3] %vm1464, %v1460
        %v1468 = vcombine.low %v1293, %v1299
        %v1470 = vunpack.c.l.s4 1966171168
        %v1471 = vunpack.c.0.s8 %v1470
        %v1472 = vlaneseq
        %v1473 = vshrl.u32 %v1472, 7
        %v1474 = vsub.s32 %v1471, %v1473
        %v1475 = vrot.slane %v1468, %v1474
        %v1477 = vunpack.c.l.s4 1966171168
        %v1478 = vunpack.c.0.s8 %v1477
        %v1479 = vlaneseq
        %v1480 = vshrl.u32 %v1479, 7
        %v1481 = vsub.s32 %v1478, %v1480
        %v1482 = vrot.slane %v1475, %v1481
        %1484 = vst.msk [vmem:[%s377] sm:$0x3] %vm1464, %v1482
        %1485 = vst [vmem:[%s400] sm:$0x1f] %v1410
        %1486 = vst [vmem:[%s400 + $0x8] sm:$0x1f] %v1412
        %v1487 = vlaneseq
        %v1488 = vshrl.u32 %v1487, 7
        %v1489 = vsub.s32 5, %v1488
        %v1490 = vrot.slane %v1416, %v1489
        %v1491 = vlaneseq
        %v1492 = vshrl.u32 %v1491, 7
        %v1493 = vsub.s32 5, %v1492
        %v1494 = vrot.slane %v1417, %v1493
        %vm1495 = vcmp.eq.s32.totalorder %v1227, %v1490
        %vm1496 = vcmp.eq.s32.totalorder %v1227, %v1494
        %vm1497 = vcmp.gt.f32.partialorder %v1293, 0.0
        %vm1498 = vcmp.gt.f32.partialorder %v1299, 0.0
        %v1499 = vsel %vm1497, 1, 0
        %v1500 = vsel %vm1498, 1, 0
        %vm1501 = vcmp.eq.s32.totalorder %v1499, 1
        %vm1502 = vcmp.eq.s32.totalorder %v1500, 1
        %vm1503 = vmand %vm1495, %vm1501
        %vm1504 = vmand %vm1496, %vm1502
        %v1505 = vsel %vm1503, %v1438, 0.0
        %v1506 = vsel %vm1504, %v1444, 0.0
        %1507 = vst [vmem:[%s370] sm:$0xff] %v1505
        %1508 = vst [vmem:[%s370 + $0x8] sm:$0xff] %v1506
        %s1509 = sand.u32 %s160, 1
        %s1510 = scalar_lea.sflag [#allocation4], %s1509
        %s1511 = sand.u32 %s160, 1
        %s1512 = smul.addr %s1511, 2
        %s1513 = scalar_lea.vmem [#allocation5], %s1512
        %p1514 = scmp.lt.s32.totalorder %s27, 1
        %s1515 = scalar_select %p1514, %s27, 1
        %s1516 = smul.addr %s1515, 2
        %s1517 = smul.addr %s1516, 8
        %s1518 = scalar_lea.vmem %s6, %s1517
        %s1519 = sand.u32 %s27, 1
        %s1520 = scalar_lea.sflag [#allocation7], %s1519
        %s1521 = sand.u32 %s212, 1
        %s1522 = smul.addr %s1521, 16
        %s1523 = scalar_lea.vmem [#allocation6], %s1522
        %s1524 = sand.u32 %s27, 1
        %s1525 = scalar_lea.sflag [#allocation7], %s1524
        %s1526 = sand.u32 %s238, 1
        %s1527 = smul.addr %s1526, 2
        %s1528 = scalar_lea.vmem [#allocation8], %s1527
        // Predicated region
        $region45: #{tpu_custom_call.1} parent=39 // pred_check
          %p1529 = pneg %p170
        $region46: #{tpu_custom_call.1} parent=39 // pred_check_branch
          %1531 = sbr.rel (%p1529) target = $region48
        $region47: #{tpu_custom_call.1} parent=39 // pred_region
          %s1533 = ssub.s32 32, 32
          %1534 = vsyncadd %s1510, %s1533
          %s1535 = smul.addr %s27, 2
          %s1536 = smul.addr %s1535, 16
          %s1537 = scalar_lea.hbm %s5, %s1536
          %s1539 = sshll.u32 %s1513, 4
          %s1540 = int_to_ptr.vmem [resolvable:$true] %s1539
          %1542 = dma.vmem_to_hbm [thread:$0]  %s1540, 32, %s1537, %s1510
        $region48: #{tpu_custom_call.1} parent=39 // pred_fallthru
          _
        // Predicated region
        $region49: #{tpu_custom_call.1} parent=39 // pred_check
          %p1543 = pneg %p196
        $region50: #{tpu_custom_call.1} parent=39 // pred_check_branch
          %1545 = sbr.rel (%p1543) target = $region52
        $region51: #{tpu_custom_call.1} parent=39 // pred_region
          _
        $region52: #{tpu_custom_call.1} parent=39 // pred_fallthru
          _
        // Predicated region
        $region53: #{tpu_custom_call.1} parent=39 // pred_check
          %p1546 = pneg %p222
        $region54: #{tpu_custom_call.1} parent=39 // pred_check_branch
          %1548 = sbr.rel (%p1546) target = $region56
        $region55: #{tpu_custom_call.1} parent=39 // pred_region
          %s1550 = ssub.s32 256, 256
          %1551 = vsyncadd %s1520, %s1550
          %s1552 = smul.addr %s27, 2
          %s1553 = smul.addr %s1552, 128
          %s1554 = scalar_lea.hbm %s7, %s1553
          %s1556 = sshll.u32 %s1523, 4
          %s1557 = int_to_ptr.vmem [resolvable:$true] %s1556
          %1559 = dma.vmem_to_hbm [thread:$0]  %s1557, 256, %s1554, %s1520
        $region56: #{tpu_custom_call.1} parent=39 // pred_fallthru
          _
        // Predicated region
        $region57: #{tpu_custom_call.1} parent=39 // pred_check
          %p1560 = pneg %p248
        $region58: #{tpu_custom_call.1} parent=39 // pred_check_branch
          %1562 = sbr.rel (%p1560) target = $region60
        $region59: #{tpu_custom_call.1} parent=39 // pred_region
          %s1564 = ssub.s32 32, 32
          %1565 = vsyncadd %s1525, %s1564
          %s1566 = smul.addr %s27, 2
          %s1567 = smul.addr %s1566, 16
          %s1568 = scalar_lea.hbm %s8, %s1567
          %s1570 = sshll.u32 %s1528, 4
          %s1571 = int_to_ptr.vmem [resolvable:$true] %s1570
          %1573 = dma.vmem_to_hbm [thread:$0]  %s1571, 32, %s1568, %s1525
        $region60: #{tpu_custom_call.1} parent=39 // pred_fallthru
          _
      $region40: #{tpu_custom_call.1} parent=5 // pred_fallthru
        _
      %p1574 = scmp.le.s32.totalorder 2, %s22
      // Predicated region
      $region61: #{tpu_custom_call.1} parent=5 // pred_check
        %p1575 = pneg %p1574
      $region62: #{tpu_custom_call.1} parent=5 // pred_check_branch
        %1577 = sbr.rel (%p1575) target = $region64
      $region63: #{tpu_custom_call.1} parent=5 // pred_region
        %s1578 = ssub.s32 %s22, 2
        // Predicated region
        $region65: #{tpu_custom_call.1} parent=63 // pred_check
          %p1579 = pneg %p176
        $region66: #{tpu_custom_call.1} parent=63 // pred_check_branch
          %1581 = sbr.rel (%p1579) target = $region68
        $region67: #{tpu_custom_call.1} parent=63 // pred_region
          %s1582 = sand.u32 %s161, 1
          %s1583 = scalar_lea.sflag [#allocation4], %s1582
          %s1584 = sand.u32 %s161, 1
          %s1585 = smul.addr %s1584, 2
          %s1586 = scalar_lea.vmem [#allocation5], %s1585
          %1587 = dma.done %s1583, 32
        $region68: #{tpu_custom_call.1} parent=63 // pred_fallthru
          _
        // Predicated region
        $region69: #{tpu_custom_call.1} parent=63 // pred_check
          %p1588 = pneg %p202
        $region70: #{tpu_custom_call.1} parent=63 // pred_check_branch
          %1590 = sbr.rel (%p1588) target = $region72
        $region71: #{tpu_custom_call.1} parent=63 // pred_region
          %p1591 = scmp.lt.s32.totalorder %s28, 1
          %s1592 = scalar_select %p1591, %s28, 1
          %s1593 = smul.addr %s1592, 2
          %s1594 = smul.addr %s1593, 8
          %s1595 = scalar_lea.vmem %s6, %s1594
        $region72: #{tpu_custom_call.1} parent=63 // pred_fallthru
          _
        // Predicated region
        $region73: #{tpu_custom_call.1} parent=63 // pred_check
          %p1596 = pneg %p228
        $region74: #{tpu_custom_call.1} parent=63 // pred_check_branch
          %1598 = sbr.rel (%p1596) target = $region76
        $region75: #{tpu_custom_call.1} parent=63 // pred_region
          %s1599 = sand.u32 %s28, 1
          %s1600 = scalar_lea.sflag [#allocation7], %s1599
          %s1601 = sand.u32 %s213, 1
          %s1602 = smul.addr %s1601, 16
          %s1603 = scalar_lea.vmem [#allocation6], %s1602
          %1604 = dma.done %s1600, 256
        $region76: #{tpu_custom_call.1} parent=63 // pred_fallthru
          _
        // Predicated region
        $region77: #{tpu_custom_call.1} parent=63 // pred_check
          %p1605 = pneg %p254
        $region78: #{tpu_custom_call.1} parent=63 // pred_check_branch
          %1607 = sbr.rel (%p1605) target = $region80
        $region79: #{tpu_custom_call.1} parent=63 // pred_region
          %s1608 = sand.u32 %s28, 1
          %s1609 = scalar_lea.sflag [#allocation7], %s1608
          %s1610 = sand.u32 %s239, 1
          %s1611 = smul.addr %s1610, 2
          %s1612 = scalar_lea.vmem [#allocation8], %s1611
          %1613 = dma.done %s1609, 32
        $region80: #{tpu_custom_call.1} parent=63 // pred_fallthru
          _
      $region64: #{tpu_custom_call.1} parent=5 // pred_fallthru
        _
    $region6: #{tpu_custom_call.1} parent=1 // loop_footer
      %s26 = sadd.s32 1, %s22
    $region7: #{tpu_custom_call.1} parent=1 // loop_footer_branch
      %21 = sbr.rel target = $region3
    $region8: #{tpu_custom_call.1} parent=1 // loop_exit
      _
    %1614 = vsyncpa [#allocation3], 1
    %s1615 = scalar_lea.sflag [#allocation3], 1
    %1616 = vsyncpa %s1615, 1
    %1617 = vsyncpa [#allocation4], 1
    %s1618 = scalar_lea.sflag [#allocation4], 1
    %1619 = vsyncpa %s1618, 1
    %1620 = vsyncpa [#allocation7], 1
    %s1621 = scalar_lea.sflag [#allocation7], 1
    %1622 = vsyncpa %s1621, 1

</llo_original>
